<compile_context>
chip_gen: v5e
topology: v5e:2x2
jax: 0.10.0
libtpu: 0.0.40
codegen_flags: <defaults>
</compile_context>

<pallas_src>
import functools

import jax
import jax.numpy as jnp
from jax.experimental import pallas as pl
from jax.experimental.pallas import tpu as pltpu

_NEG_INF = -1e30
_LN_EPS = 1e-5


# ---------------------------------------------------------------------------
# In-kernel helpers (pure functions on values)
# ---------------------------------------------------------------------------

def _softplus(x):
    # numerically stable softplus without relying on jnp.log1p lowering
    return jnp.maximum(x, 0.0) + jnp.log(1.0 + jnp.exp(-jnp.abs(x)))


def _layernorm(x, g, b, eps):
    mu = jnp.mean(x, axis=-1, keepdims=True)
    var = jnp.mean((x - mu) ** 2, axis=-1, keepdims=True)
    return (x - mu) * jax.lax.rsqrt(var + eps) * g + b


# ---------------------------------------------------------------------------
# Fused Generator kernel
# ---------------------------------------------------------------------------

def _generator_kernel(h_ref,
                      wspan_c_ref, wspan_w_ref, wval_ref, wout_ref,
                      fc1w_ref, fc1b_ref, fc2w_ref, fc2b_ref,
                      n1g_ref, n1b_ref, n2g_ref, n2b_ref,
                      wemb_ref, bemb_ref,
                      out_ref,
                      *, B, M, K, D, nb_layers, eps):
    H = K * D
    h = h_ref[...]                                   # (B*M, H) f32

    # Weights stay VMEM-resident for the whole kernel (few KiB total).
    wspan_c, wspan_w = wspan_c_ref[...], wspan_w_ref[...]
    wval, wout = wval_ref[...], wout_ref[...]
    fc1w, fc1b = fc1w_ref[...], fc1b_ref[...]
    fc2w, fc2b = fc2w_ref[...], fc2b_ref[...]
    n1g, n1b = n1g_ref[...], n1b_ref[...]
    n2g, n2b = n2g_ref[...], n2b_ref[...]

    # Relative key/query positions, hoisted out of the layer/head loops.
    # Iotas live on the minor (sublane/lane) dims of a rank-3 value.
    kpos = jax.lax.broadcasted_iota(jnp.int32, (1, M, M), 2).astype(jnp.float32)
    qpos = jax.lax.broadcasted_iota(jnp.int32, (1, M, M), 1).astype(jnp.float32)
    rel = kpos - qpos                                # (1, M, M)

    def transformer_layer(h):
        # --- multi-head selective self-attention (no bias on projections) ---
        # Span weights were column-split at init: one dot for all centers, one for all
        # widths -> no stride-2 lane slicing, prologue math fused across heads.
        centers_all = jnp.dot(h, wspan_c, preferred_element_type=jnp.float32) * float(M)
        widths_all = _softplus(
            jnp.dot(h, wspan_w, preferred_element_type=jnp.float32)) + 1.0    # (B*M, K)
        inv2w2_all = 0.5 / (widths_all * widths_all)                          # (B*M, K)
        value_all = jnp.dot(h, wval, preferred_element_type=jnp.float32)      # (B*M, H)

        attn_out = None
        for k in range(K):
            # TODO(synk): AutoSelectAttention is not provided in the source; this is a
            # deterministic Gaussian-window stand-in mapping span=(center, width) to
            # attention logits over the M key positions; select.repeat_val == identity.
            center = centers_all[:, k:k + 1].reshape(B, M, 1)                 # (B, M, 1)
            inv2w2 = inv2w2_all[:, k:k + 1].reshape(B, M, 1)                  # (B, M, 1)
            diff = rel - center                                               # (B, M, M)
            logits = -(diff * diff) * inv2w2

            # softmax over keys; reciprocal goes to the EUP slot.
            mx = jnp.max(logits, axis=-1, keepdims=True)
            p = jnp.exp(logits - mx)
            p = p * pl.reciprocal(jnp.sum(p, axis=-1, keepdims=True), approx=True)

            v = value_all[:, k * D:(k + 1) * D].reshape(B, M, D)              # (B, M, D)

            # P @ V as one batched contraction on the MXU (replaces the serial MAC chain).
            ctx = jnp.einsum('bqm,bmd->bqd', p, v,
                             preferred_element_type=jnp.float32)              # (B, M, D)

            # Head-slice of the output projection; summing the K partials is identical
            # to concat(ctx_heads) @ Wout but needs no lane concat.
            part = jnp.dot(ctx.reshape(B * M, D), wout[k * D:(k + 1) * D, :],
                           preferred_element_type=jnp.float32)                # (B*M, H)
            attn_out = part if attn_out is None else attn_out + part
        # TODO(synk): norm_span running statistic (training-time bookkeeping) omitted.

        # residual + LayerNorm1 fused
        h1 = _layernorm(h + attn_out, n1g, n1b, eps)

        # feed-forward (ReLU fused; nn.Dropout is eval-mode identity)
        f = jnp.maximum(
            jnp.dot(h1, fc1w, preferred_element_type=jnp.float32) + fc1b, 0.0)
        f = jnp.dot(f, fc2w, preferred_element_type=jnp.float32) + fc2b

        # residual + LayerNorm2 fused
        return _layernorm(h1 + f, n2g, n2b, eps)

    # Weight-shared layer applied nb_layers times (small static count -> unrolled).
    for _ in range(nb_layers):
        h = transformer_layer(h)

    # --- out_emb projection fused with log_softmax ---
    # Padded vocab columns are masked solely by the -1e30 entries pre-baked into the
    # bias at init (padded weight columns are zero); no in-kernel iota/where needed.
    logits = jnp.dot(h, wemb_ref[...], preferred_element_type=jnp.float32) + bemb_ref[...]
    mx = jnp.max(logits, axis=-1, keepdims=True)
    z = logits - mx
    lse = jnp.log(jnp.sum(jnp.exp(z), axis=-1, keepdims=True))
    out_ref[...] = z - lse


# ---------------------------------------------------------------------------
# Wrapper: one jitted forward = one pallas_call + output slice
# ---------------------------------------------------------------------------

def _round_up(x, m):
    return ((x + m - 1) // m) * m


def build_generator_fn(cfg):
    B, M = cfg["batch_size"], cfg["block_size"]
    H, K, D = cfg["hidden_size"], cfg["nb_heads"], cfg["head_dim"]
    V = cfg["vocab_size"]
    inner = cfg["inner_hidden_size"]
    Vpad = _round_up(V, 128)
    nb_layers = cfg["nb_layers_gen"]
    assert H == K * D
    BM = B * M

    kernel = functools.partial(
        _generator_kernel, B=B, M=M, K=K, D=D, nb_layers=nb_layers, eps=_LN_EPS)

    # Advisory cost estimate so XLA can schedule surrounding ops sensibly.
    per_layer_flops = (2 * BM * H * (2 * K)        # span center/width projections
                       + 2 * BM * H * H            # value projection
                       + 2 * B * M * M * H         # P @ V over all heads
                       + 2 * BM * H * H            # output projection
                       + 2 * BM * H * inner        # fc1
                       + 2 * BM * inner * H)       # fc2
    flops = nb_layers * per_layer_flops + 2 * BM * H * Vpad
    transcendentals = nb_layers * (K * B * M * M + BM * K + 2 * BM) + BM * Vpad
    param_elems = (2 * H * K + 2 * H * H + H * inner + inner + inner * H + H
                   + 4 * H + H * Vpad + Vpad)
    bytes_accessed = 4 * (BM * H + param_elems + BM * Vpad)

    vmem = functools.partial(pl.BlockSpec, memory_space=pltpu.MemorySpace.VMEM)
    call = pl.pallas_call(
        kernel,
        out_shape=jax.ShapeDtypeStruct((BM, Vpad), jnp.float32),   # lane-dense output
        in_specs=[vmem() for _ in range(15)],
        out_specs=vmem(),
        cost_estimate=pl.CostEstimate(flops=flops,
                                      transcendentals=transcendentals,
                                      bytes_accessed=bytes_accessed),
    )

    @jax.jit
    def forward(h, params):
        p = params
        out = call(
            h.reshape(BM, H),
            p["proj_span_c_w"], p["proj_span_w_w"], p["proj_val_w"], p["proj_out_w"],
            p["fc1_w"], p["fc1_b"], p["fc2_w"], p["fc2_b"],
            p["norm1_g"], p["norm1_b"], p["norm2_g"], p["norm2_b"],
            p["out_emb_w"], p["out_emb_b"],
        )
        return out[:, :V].reshape(B, M, V)

    return forward


# ---------------------------------------------------------------------------
# Deterministic parameter init (weights stored pre-transposed as (Din, Dout))
# TODO(synk): for realistic sizes store the matmul weights in bf16 (f32 accumulate).
# ---------------------------------------------------------------------------

def init_params(key, cfg):
    H, K = cfg["hidden_size"], cfg["nb_heads"]
    inner, V = cfg["inner_hidden_size"], cfg["vocab_size"]
    Vpad = _round_up(V, 128)
    ks = jax.random.split(key, 6)
    s = 0.02

    # proj_span (H, 2K) with per-head (center, width) column pairs, split at init into
    # [all centers | all widths] so the kernel never does stride-2 lane slices.
    span_w = s * jax.random.normal(ks[0], (H, 2 * K), jnp.float32)

    out_emb_w = s * jax.random.normal(ks[5], (H, V), jnp.float32)
    out_emb_w = jnp.pad(out_emb_w, ((0, 0), (0, Vpad - V)))     # lane-dense vocab pad
    # Padded vocab columns are masked by a -1e30 bias (the only masking mechanism).
    out_emb_b = jnp.concatenate(
        [jnp.zeros((1, V), jnp.float32),
         jnp.full((1, Vpad - V), _NEG_INF, jnp.float32)], axis=-1)

    return {
        "proj_span_c_w": span_w[:, 0::2],
        "proj_span_w_w": span_w[:, 1::2],
        "proj_val_w": s * jax.random.normal(ks[1], (H, H), jnp.float32),
        "proj_out_w": s * jax.random.normal(ks[2], (H, H), jnp.float32),
        "fc1_w": s * jax.random.normal(ks[3], (H, inner), jnp.float32),
        "fc1_b": jnp.zeros((1, inner), jnp.float32),
        "fc2_w": s * jax.random.normal(ks[4], (inner, H), jnp.float32),
        "fc2_b": jnp.zeros((1, H), jnp.float32),
        "norm1_g": jnp.ones((1, H), jnp.float32),
        "norm1_b": jnp.zeros((1, H), jnp.float32),
        "norm2_g": jnp.ones((1, H), jnp.float32),
        "norm2_b": jnp.zeros((1, H), jnp.float32),
        "out_emb_w": out_emb_w,
        "out_emb_b": out_emb_b,
    }


# ---------------------------------------------------------------------------
# Main
# ---------------------------------------------------------------------------

if __name__ == "__main__":
    cfg = dict(
        vocab_size=50,
        batch_size=2,
        block_size=8,          # sequence length M
        hidden_size=32,
        inner_hidden_size=64,
        nb_heads=4,
        head_dim=8,
        nb_layers_gen=2,
        dropout=0.1,           # eval-mode identity
    )

    key = jax.random.PRNGKey(0)
    k_param, k_data = jax.random.split(key)
    params = init_params(k_param, cfg)
    h = jax.random.normal(
        k_data, (cfg["batch_size"], cfg["block_size"], cfg["hidden_size"]), jnp.float32)

    forward = build_generator_fn(cfg)
    out = forward(h, params)
    jax.block_until_ready(out)

    assert out.shape == (cfg["batch_size"], cfg["block_size"], cfg["vocab_size"])
    assert bool(jnp.all(jnp.isfinite(out)))
    prob_sums = jnp.sum(jnp.exp(out), axis=-1)
    assert bool(jnp.all(jnp.abs(prob_sums - 1.0) < 1e-3))
    print("KERNEL_OK")
</pallas_src>

<mosaic_0001>
module attributes {stable_mosaic.version = 11 : i64} {
  func.func @_generator_kernel(%arg0: memref<16x32xf32, #tpu.memory_space<vmem>>, %arg1: memref<32x4xf32, #tpu.memory_space<vmem>>, %arg2: memref<32x4xf32, #tpu.memory_space<vmem>>, %arg3: memref<32x32xf32, #tpu.memory_space<vmem>>, %arg4: memref<32x32xf32, #tpu.memory_space<vmem>>, %arg5: memref<32x64xf32, #tpu.memory_space<vmem>>, %arg6: memref<1x64xf32, #tpu.memory_space<vmem>>, %arg7: memref<64x32xf32, #tpu.memory_space<vmem>>, %arg8: memref<1x32xf32, #tpu.memory_space<vmem>>, %arg9: memref<1x32xf32, #tpu.memory_space<vmem>>, %arg10: memref<1x32xf32, #tpu.memory_space<vmem>>, %arg11: memref<1x32xf32, #tpu.memory_space<vmem>>, %arg12: memref<1x32xf32, #tpu.memory_space<vmem>>, %arg13: memref<32x128xf32, #tpu.memory_space<vmem>>, %arg14: memref<1x128xf32, #tpu.memory_space<vmem>>, %arg15: memref<16x128xf32, #tpu.memory_space<vmem>>) attributes {dimension_semantics = [], scalar_prefetch = 0 : i64, scratch_operands = 0 : i64, tpu.core_type = #tpu.core_type<tc>} {
    %c0 = arith.constant 0 : index
    %c0_0 = arith.constant 0 : index
    %0 = vector.load %arg0[%c0, %c0_0] : memref<16x32xf32, #tpu.memory_space<vmem>>, vector<16x32xf32>
    %c0_1 = arith.constant 0 : index
    %c0_2 = arith.constant 0 : index
    %1 = vector.load %arg1[%c0_1, %c0_2] : memref<32x4xf32, #tpu.memory_space<vmem>>, vector<32x4xf32>
    %c0_3 = arith.constant 0 : index
    %c0_4 = arith.constant 0 : index
    %2 = vector.load %arg2[%c0_3, %c0_4] : memref<32x4xf32, #tpu.memory_space<vmem>>, vector<32x4xf32>
    %c0_5 = arith.constant 0 : index
    %c0_6 = arith.constant 0 : index
    %3 = vector.load %arg3[%c0_5, %c0_6] : memref<32x32xf32, #tpu.memory_space<vmem>>, vector<32x32xf32>
    %c0_7 = arith.constant 0 : index
    %c0_8 = arith.constant 0 : index
    %4 = vector.load %arg4[%c0_7, %c0_8] : memref<32x32xf32, #tpu.memory_space<vmem>>, vector<32x32xf32>
    %c0_9 = arith.constant 0 : index
    %c0_10 = arith.constant 0 : index
    %5 = vector.load %arg5[%c0_9, %c0_10] : memref<32x64xf32, #tpu.memory_space<vmem>>, vector<32x64xf32>
    %c0_11 = arith.constant 0 : index
    %c0_12 = arith.constant 0 : index
    %6 = vector.load %arg6[%c0_11, %c0_12] : memref<1x64xf32, #tpu.memory_space<vmem>>, vector<1x64xf32>
    %c0_13 = arith.constant 0 : index
    %c0_14 = arith.constant 0 : index
    %7 = vector.load %arg7[%c0_13, %c0_14] : memref<64x32xf32, #tpu.memory_space<vmem>>, vector<64x32xf32>
    %c0_15 = arith.constant 0 : index
    %c0_16 = arith.constant 0 : index
    %8 = vector.load %arg8[%c0_15, %c0_16] : memref<1x32xf32, #tpu.memory_space<vmem>>, vector<1x32xf32>
    %c0_17 = arith.constant 0 : index
    %c0_18 = arith.constant 0 : index
    %9 = vector.load %arg9[%c0_17, %c0_18] : memref<1x32xf32, #tpu.memory_space<vmem>>, vector<1x32xf32>
    %c0_19 = arith.constant 0 : index
    %c0_20 = arith.constant 0 : index
    %10 = vector.load %arg10[%c0_19, %c0_20] : memref<1x32xf32, #tpu.memory_space<vmem>>, vector<1x32xf32>
    %c0_21 = arith.constant 0 : index
    %c0_22 = arith.constant 0 : index
    %11 = vector.load %arg11[%c0_21, %c0_22] : memref<1x32xf32, #tpu.memory_space<vmem>>, vector<1x32xf32>
    %c0_23 = arith.constant 0 : index
    %c0_24 = arith.constant 0 : index
    %12 = vector.load %arg12[%c0_23, %c0_24] : memref<1x32xf32, #tpu.memory_space<vmem>>, vector<1x32xf32>
    %13 = tpu.iota {dimensions = array<i32: 2>} : vector<1x8x8xi32>
    %14 = arith.sitofp %13 : vector<1x8x8xi32> to vector<1x8x8xf32>
    %15 = tpu.iota {dimensions = array<i32: 1>} : vector<1x8x8xi32>
    %16 = arith.sitofp %15 : vector<1x8x8xi32> to vector<1x8x8xf32>
    %17 = arith.subf %14, %16 : vector<1x8x8xf32>
    %cst = arith.constant dense<0.000000e+00> : vector<16x4xf32>
    %18 = tpu.matmul %0, %1, %cst {dimension_numbers = #tpu.dot_dimension_numbers<[1], [0], [0], [1], [0, 0, 1, 1], [], []>} : vector<16x32xf32>, vector<32x4xf32>, vector<16x4xf32> -> vector<16x4xf32>
    %cst_25 = arith.constant 8.000000e+00 : f32
    %19 = vector.broadcast %cst_25 : f32 to vector<16x4xf32>
    %20 = arith.mulf %18, %19 : vector<16x4xf32>
    %cst_26 = arith.constant dense<0.000000e+00> : vector<16x4xf32>
    %21 = tpu.matmul %0, %2, %cst_26 {dimension_numbers = #tpu.dot_dimension_numbers<[1], [0], [0], [1], [0, 0, 1, 1], [], []>} : vector<16x32xf32>, vector<32x4xf32>, vector<16x4xf32> -> vector<16x4xf32>
    %cst_27 = arith.constant 0.000000e+00 : f32
    %22 = vector.broadcast %cst_27 : f32 to vector<16x4xf32>
    %23 = arith.maximumf %21, %22 : vector<16x4xf32>
    %24 = math.absf %21 : vector<16x4xf32>
    %cst_28 = arith.constant 0.000000e+00 : f32
    %25 = vector.broadcast %cst_28 : f32 to vector<16x4xf32>
    %26 = arith.subf %25, %24 : vector<16x4xf32>
    %27 = math.exp %26 : vector<16x4xf32>
    %cst_29 = arith.constant 1.000000e+00 : f32
    %28 = vector.broadcast %cst_29 : f32 to vector<16x4xf32>
    %29 = arith.addf %28, %27 : vector<16x4xf32>
    %30 = math.log %29 : vector<16x4xf32>
    %31 = arith.addf %23, %30 : vector<16x4xf32>
    %cst_30 = arith.constant 1.000000e+00 : f32
    %32 = vector.broadcast %cst_30 : f32 to vector<16x4xf32>
    %33 = arith.addf %31, %32 : vector<16x4xf32>
    %34 = arith.mulf %33, %33 : vector<16x4xf32>
    %cst_31 = arith.constant 5.000000e-01 : f32
    %35 = vector.broadcast %cst_31 : f32 to vector<16x4xf32>
    %36 = arith.divf %35, %34 : vector<16x4xf32>
    %cst_32 = arith.constant dense<0.000000e+00> : vector<16x32xf32>
    %37 = tpu.matmul %0, %3, %cst_32 {dimension_numbers = #tpu.dot_dimension_numbers<[1], [0], [0], [1], [0, 0, 1, 1], [], []>} : vector<16x32xf32>, vector<32x32xf32>, vector<16x32xf32> -> vector<16x32xf32>
    %38 = vector.extract_strided_slice %20 {offsets = [0, 0], sizes = [16, 1], strides = [1, 1]} : vector<16x4xf32> to vector<16x1xf32>
    %39 = vector.shape_cast %38 : vector<16x1xf32> to vector<2x8x1xf32>
    %40 = vector.extract_strided_slice %36 {offsets = [0, 0], sizes = [16, 1], strides = [1, 1]} : vector<16x4xf32> to vector<16x1xf32>
    %41 = vector.shape_cast %40 : vector<16x1xf32> to vector<2x8x1xf32>
    %42 = vector.broadcast %17 : vector<1x8x8xf32> to vector<2x8x8xf32>
    %43 = vector.broadcast %39 : vector<2x8x1xf32> to vector<2x8x8xf32>
    %44 = arith.subf %42, %43 : vector<2x8x8xf32>
    %45 = arith.mulf %44, %44 : vector<2x8x8xf32>
    %cst_33 = arith.constant 0.000000e+00 : f32
    %46 = vector.broadcast %cst_33 : f32 to vector<2x8x8xf32>
    %47 = arith.subf %46, %45 : vector<2x8x8xf32>
    %48 = vector.broadcast %41 : vector<2x8x1xf32> to vector<2x8x8xf32>
    %49 = arith.mulf %47, %48 : vector<2x8x8xf32>
    %cst_34 = arith.constant dense<0xFF800000> : vector<2x8xf32>
    %50 = vector.multi_reduction <maximumf>, %49, %cst_34 [2] : vector<2x8x8xf32> to vector<2x8xf32>
    %51 = vector.shape_cast %50 : vector<2x8xf32> to vector<2x8x1xf32>
    %52 = vector.broadcast %51 : vector<2x8x1xf32> to vector<2x8x8xf32>
    %53 = arith.subf %49, %52 : vector<2x8x8xf32>
    %54 = math.exp %53 : vector<2x8x8xf32>
    %cst_35 = arith.constant dense<0.000000e+00> : vector<2x8xf32>
    %55 = vector.multi_reduction <add>, %54, %cst_35 [2] : vector<2x8x8xf32> to vector<2x8xf32>
    %56 = vector.shape_cast %55 : vector<2x8xf32> to vector<2x8x1xf32>
    %57 = tpu.reciprocal %56 {approx = true} : vector<2x8x1xf32> -> vector<2x8x1xf32>
    %58 = vector.broadcast %57 : vector<2x8x1xf32> to vector<2x8x8xf32>
    %59 = arith.mulf %54, %58 : vector<2x8x8xf32>
    %60 = vector.extract_strided_slice %37 {offsets = [0, 0], sizes = [16, 8], strides = [1, 1]} : vector<16x32xf32> to vector<16x8xf32>
    %61 = vector.shape_cast %60 : vector<16x8xf32> to vector<2x8x8xf32>
    "tpu.trace_start"() <{level = 10 : i32, message = "bqm,bmd->bqd"}> : () -> ()
    %cst_36 = arith.constant dense<0.000000e+00> : vector<2x8x8xf32>
    %62 = tpu.matmul %59, %61, %cst_36 {dimension_numbers = #tpu.dot_dimension_numbers<[2], [1], [1], [2], [0, 0, 0, 1, 1, 2], [0], [0]>} : vector<2x8x8xf32>, vector<2x8x8xf32>, vector<2x8x8xf32> -> vector<2x8x8xf32>
    "tpu.trace_stop"() : () -> ()
    %63 = vector.shape_cast %62 : vector<2x8x8xf32> to vector<16x8xf32>
    %64 = vector.extract_strided_slice %4 {offsets = [0, 0], sizes = [8, 32], strides = [1, 1]} : vector<32x32xf32> to vector<8x32xf32>
    %cst_37 = arith.constant dense<0.000000e+00> : vector<16x32xf32>
    %65 = tpu.matmul %63, %64, %cst_37 {dimension_numbers = #tpu.dot_dimension_numbers<[1], [0], [0], [1], [0, 0, 1, 1], [], []>} : vector<16x8xf32>, vector<8x32xf32>, vector<16x32xf32> -> vector<16x32xf32>
    %66 = vector.extract_strided_slice %20 {offsets = [0, 1], sizes = [16, 1], strides = [1, 1]} : vector<16x4xf32> to vector<16x1xf32>
    %67 = vector.shape_cast %66 : vector<16x1xf32> to vector<2x8x1xf32>
    %68 = vector.extract_strided_slice %36 {offsets = [0, 1], sizes = [16, 1], strides = [1, 1]} : vector<16x4xf32> to vector<16x1xf32>
    %69 = vector.shape_cast %68 : vector<16x1xf32> to vector<2x8x1xf32>
    %70 = vector.broadcast %17 : vector<1x8x8xf32> to vector<2x8x8xf32>
    %71 = vector.broadcast %67 : vector<2x8x1xf32> to vector<2x8x8xf32>
    %72 = arith.subf %70, %71 : vector<2x8x8xf32>
    %73 = arith.mulf %72, %72 : vector<2x8x8xf32>
    %cst_38 = arith.constant 0.000000e+00 : f32
    %74 = vector.broadcast %cst_38 : f32 to vector<2x8x8xf32>
    %75 = arith.subf %74, %73 : vector<2x8x8xf32>
    %76 = vector.broadcast %69 : vector<2x8x1xf32> to vector<2x8x8xf32>
    %77 = arith.mulf %75, %76 : vector<2x8x8xf32>
    %cst_39 = arith.constant dense<0xFF800000> : vector<2x8xf32>
    %78 = vector.multi_reduction <maximumf>, %77, %cst_39 [2] : vector<2x8x8xf32> to vector<2x8xf32>
    %79 = vector.shape_cast %78 : vector<2x8xf32> to vector<2x8x1xf32>
    %80 = vector.broadcast %79 : vector<2x8x1xf32> to vector<2x8x8xf32>
    %81 = arith.subf %77, %80 : vector<2x8x8xf32>
    %82 = math.exp %81 : vector<2x8x8xf32>
    %cst_40 = arith.constant dense<0.000000e+00> : vector<2x8xf32>
    %83 = vector.multi_reduction <add>, %82, %cst_40 [2] : vector<2x8x8xf32> to vector<2x8xf32>
    %84 = vector.shape_cast %83 : vector<2x8xf32> to vector<2x8x1xf32>
    %85 = tpu.reciprocal %84 {approx = true} : vector<2x8x1xf32> -> vector<2x8x1xf32>
    %86 = vector.broadcast %85 : vector<2x8x1xf32> to vector<2x8x8xf32>
    %87 = arith.mulf %82, %86 : vector<2x8x8xf32>
    %88 = vector.extract_strided_slice %37 {offsets = [0, 8], sizes = [16, 8], strides = [1, 1]} : vector<16x32xf32> to vector<16x8xf32>
    %89 = vector.shape_cast %88 : vector<16x8xf32> to vector<2x8x8xf32>
    "tpu.trace_start"() <{level = 10 : i32, message = "bqm,bmd->bqd"}> : () -> ()
    %cst_41 = arith.constant dense<0.000000e+00> : vector<2x8x8xf32>
    %90 = tpu.matmul %87, %89, %cst_41 {dimension_numbers = #tpu.dot_dimension_numbers<[2], [1], [1], [2], [0, 0, 0, 1, 1, 2], [0], [0]>} : vector<2x8x8xf32>, vector<2x8x8xf32>, vector<2x8x8xf32> -> vector<2x8x8xf32>
    "tpu.trace_stop"() : () -> ()
    %91 = vector.shape_cast %90 : vector<2x8x8xf32> to vector<16x8xf32>
    %92 = vector.extract_strided_slice %4 {offsets = [8, 0], sizes = [8, 32], strides = [1, 1]} : vector<32x32xf32> to vector<8x32xf32>
    %cst_42 = arith.constant dense<0.000000e+00> : vector<16x32xf32>
    %93 = tpu.matmul %91, %92, %cst_42 {dimension_numbers = #tpu.dot_dimension_numbers<[1], [0], [0], [1], [0, 0, 1, 1], [], []>} : vector<16x8xf32>, vector<8x32xf32>, vector<16x32xf32> -> vector<16x32xf32>
    %94 = arith.addf %65, %93 : vector<16x32xf32>
    %95 = vector.extract_strided_slice %20 {offsets = [0, 2], sizes = [16, 1], strides = [1, 1]} : vector<16x4xf32> to vector<16x1xf32>
    %96 = vector.shape_cast %95 : vector<16x1xf32> to vector<2x8x1xf32>
    %97 = vector.extract_strided_slice %36 {offsets = [0, 2], sizes = [16, 1], strides = [1, 1]} : vector<16x4xf32> to vector<16x1xf32>
    %98 = vector.shape_cast %97 : vector<16x1xf32> to vector<2x8x1xf32>
    %99 = vector.broadcast %17 : vector<1x8x8xf32> to vector<2x8x8xf32>
    %100 = vector.broadcast %96 : vector<2x8x1xf32> to vector<2x8x8xf32>
    %101 = arith.subf %99, %100 : vector<2x8x8xf32>
    %102 = arith.mulf %101, %101 : vector<2x8x8xf32>
    %cst_43 = arith.constant 0.000000e+00 : f32
    %103 = vector.broadcast %cst_43 : f32 to vector<2x8x8xf32>
    %104 = arith.subf %103, %102 : vector<2x8x8xf32>
    %105 = vector.broadcast %98 : vector<2x8x1xf32> to vector<2x8x8xf32>
    %106 = arith.mulf %104, %105 : vector<2x8x8xf32>
    %cst_44 = arith.constant dense<0xFF800000> : vector<2x8xf32>
    %107 = vector.multi_reduction <maximumf>, %106, %cst_44 [2] : vector<2x8x8xf32> to vector<2x8xf32>
    %108 = vector.shape_cast %107 : vector<2x8xf32> to vector<2x8x1xf32>
    %109 = vector.broadcast %108 : vector<2x8x1xf32> to vector<2x8x8xf32>
    %110 = arith.subf %106, %109 : vector<2x8x8xf32>
    %111 = math.exp %110 : vector<2x8x8xf32>
    %cst_45 = arith.constant dense<0.000000e+00> : vector<2x8xf32>
    %112 = vector.multi_reduction <add>, %111, %cst_45 [2] : vector<2x8x8xf32> to vector<2x8xf32>
    %113 = vector.shape_cast %112 : vector<2x8xf32> to vector<2x8x1xf32>
    %114 = tpu.reciprocal %113 {approx = true} : vector<2x8x1xf32> -> vector<2x8x1xf32>
    %115 = vector.broadcast %114 : vector<2x8x1xf32> to vector<2x8x8xf32>
    %116 = arith.mulf %111, %115 : vector<2x8x8xf32>
    %117 = vector.extract_strided_slice %37 {offsets = [0, 16], sizes = [16, 8], strides = [1, 1]} : vector<16x32xf32> to vector<16x8xf32>
    %118 = vector.shape_cast %117 : vector<16x8xf32> to vector<2x8x8xf32>
    "tpu.trace_start"() <{level = 10 : i32, message = "bqm,bmd->bqd"}> : () -> ()
    %cst_46 = arith.constant dense<0.000000e+00> : vector<2x8x8xf32>
    %119 = tpu.matmul %116, %118, %cst_46 {dimension_numbers = #tpu.dot_dimension_numbers<[2], [1], [1], [2], [0, 0, 0, 1, 1, 2], [0], [0]>} : vector<2x8x8xf32>, vector<2x8x8xf32>, vector<2x8x8xf32> -> vector<2x8x8xf32>
    "tpu.trace_stop"() : () -> ()
    %120 = vector.shape_cast %119 : vector<2x8x8xf32> to vector<16x8xf32>
    %121 = vector.extract_strided_slice %4 {offsets = [16, 0], sizes = [8, 32], strides = [1, 1]} : vector<32x32xf32> to vector<8x32xf32>
    %cst_47 = arith.constant dense<0.000000e+00> : vector<16x32xf32>
    %122 = tpu.matmul %120, %121, %cst_47 {dimension_numbers = #tpu.dot_dimension_numbers<[1], [0], [0], [1], [0, 0, 1, 1], [], []>} : vector<16x8xf32>, vector<8x32xf32>, vector<16x32xf32> -> vector<16x32xf32>
    %123 = arith.addf %94, %122 : vector<16x32xf32>
    %124 = vector.extract_strided_slice %20 {offsets = [0, 3], sizes = [16, 1], strides = [1, 1]} : vector<16x4xf32> to vector<16x1xf32>
    %125 = vector.shape_cast %124 : vector<16x1xf32> to vector<2x8x1xf32>
    %126 = vector.extract_strided_slice %36 {offsets = [0, 3], sizes = [16, 1], strides = [1, 1]} : vector<16x4xf32> to vector<16x1xf32>
    %127 = vector.shape_cast %126 : vector<16x1xf32> to vector<2x8x1xf32>
    %128 = vector.broadcast %17 : vector<1x8x8xf32> to vector<2x8x8xf32>
    %129 = vector.broadcast %125 : vector<2x8x1xf32> to vector<2x8x8xf32>
    %130 = arith.subf %128, %129 : vector<2x8x8xf32>
    %131 = arith.mulf %130, %130 : vector<2x8x8xf32>
    %cst_48 = arith.constant 0.000000e+00 : f32
    %132 = vector.broadcast %cst_48 : f32 to vector<2x8x8xf32>
    %133 = arith.subf %132, %131 : vector<2x8x8xf32>
    %134 = vector.broadcast %127 : vector<2x8x1xf32> to vector<2x8x8xf32>
    %135 = arith.mulf %133, %134 : vector<2x8x8xf32>
    %cst_49 = arith.constant dense<0xFF800000> : vector<2x8xf32>
    %136 = vector.multi_reduction <maximumf>, %135, %cst_49 [2] : vector<2x8x8xf32> to vector<2x8xf32>
    %137 = vector.shape_cast %136 : vector<2x8xf32> to vector<2x8x1xf32>
    %138 = vector.broadcast %137 : vector<2x8x1xf32> to vector<2x8x8xf32>
    %139 = arith.subf %135, %138 : vector<2x8x8xf32>
    %140 = math.exp %139 : vector<2x8x8xf32>
    %cst_50 = arith.constant dense<0.000000e+00> : vector<2x8xf32>
    %141 = vector.multi_reduction <add>, %140, %cst_50 [2] : vector<2x8x8xf32> to vector<2x8xf32>
    %142 = vector.shape_cast %141 : vector<2x8xf32> to vector<2x8x1xf32>
    %143 = tpu.reciprocal %142 {approx = true} : vector<2x8x1xf32> -> vector<2x8x1xf32>
    %144 = vector.broadcast %143 : vector<2x8x1xf32> to vector<2x8x8xf32>
    %145 = arith.mulf %140, %144 : vector<2x8x8xf32>
    %146 = vector.extract_strided_slice %37 {offsets = [0, 24], sizes = [16, 8], strides = [1, 1]} : vector<16x32xf32> to vector<16x8xf32>
    %147 = vector.shape_cast %146 : vector<16x8xf32> to vector<2x8x8xf32>
    "tpu.trace_start"() <{level = 10 : i32, message = "bqm,bmd->bqd"}> : () -> ()
    %cst_51 = arith.constant dense<0.000000e+00> : vector<2x8x8xf32>
    %148 = tpu.matmul %145, %147, %cst_51 {dimension_numbers = #tpu.dot_dimension_numbers<[2], [1], [1], [2], [0, 0, 0, 1, 1, 2], [0], [0]>} : vector<2x8x8xf32>, vector<2x8x8xf32>, vector<2x8x8xf32> -> vector<2x8x8xf32>
    "tpu.trace_stop"() : () -> ()
    %149 = vector.shape_cast %148 : vector<2x8x8xf32> to vector<16x8xf32>
    %150 = vector.extract_strided_slice %4 {offsets = [24, 0], sizes = [8, 32], strides = [1, 1]} : vector<32x32xf32> to vector<8x32xf32>
    %cst_52 = arith.constant dense<0.000000e+00> : vector<16x32xf32>
    %151 = tpu.matmul %149, %150, %cst_52 {dimension_numbers = #tpu.dot_dimension_numbers<[1], [0], [0], [1], [0, 0, 1, 1], [], []>} : vector<16x8xf32>, vector<8x32xf32>, vector<16x32xf32> -> vector<16x32xf32>
    %152 = arith.addf %123, %151 : vector<16x32xf32>
    %153 = arith.addf %0, %152 : vector<16x32xf32>
    %cst_53 = arith.constant dense<0.000000e+00> : vector<16xf32>
    %154 = vector.multi_reduction <add>, %153, %cst_53 [1] : vector<16x32xf32> to vector<16xf32>
    %155 = vector.shape_cast %154 : vector<16xf32> to vector<16x1xf32>
    %cst_54 = arith.constant 3.200000e+01 : f32
    %156 = vector.broadcast %cst_54 : f32 to vector<16x1xf32>
    %157 = arith.divf %155, %156 : vector<16x1xf32>
    %158 = vector.broadcast %157 : vector<16x1xf32> to vector<16x32xf32>
    %159 = arith.subf %153, %158 : vector<16x32xf32>
    %160 = arith.mulf %159, %159 : vector<16x32xf32>
    %cst_55 = arith.constant dense<0.000000e+00> : vector<16xf32>
    %161 = vector.multi_reduction <add>, %160, %cst_55 [1] : vector<16x32xf32> to vector<16xf32>
    %162 = vector.shape_cast %161 : vector<16xf32> to vector<16x1xf32>
    %cst_56 = arith.constant 3.200000e+01 : f32
    %163 = vector.broadcast %cst_56 : f32 to vector<16x1xf32>
    %164 = arith.divf %162, %163 : vector<16x1xf32>
    %165 = vector.broadcast %157 : vector<16x1xf32> to vector<16x32xf32>
    %166 = arith.subf %153, %165 : vector<16x32xf32>
    %cst_57 = arith.constant 9.99999974E-6 : f32
    %167 = vector.broadcast %cst_57 : f32 to vector<16x1xf32>
    %168 = arith.addf %164, %167 : vector<16x1xf32>
    %169 = math.rsqrt %168 : vector<16x1xf32>
    %170 = vector.broadcast %169 : vector<16x1xf32> to vector<16x32xf32>
    %171 = arith.mulf %166, %170 : vector<16x32xf32>
    %172 = vector.broadcast %9 : vector<1x32xf32> to vector<16x32xf32>
    %173 = arith.mulf %171, %172 : vector<16x32xf32>
    %174 = vector.broadcast %10 : vector<1x32xf32> to vector<16x32xf32>
    %175 = arith.addf %173, %174 : vector<16x32xf32>
    %cst_58 = arith.constant dense<0.000000e+00> : vector<16x64xf32>
    %176 = tpu.matmul %175, %5, %cst_58 {dimension_numbers = #tpu.dot_dimension_numbers<[1], [0], [0], [1], [0, 0, 1, 1], [], []>} : vector<16x32xf32>, vector<32x64xf32>, vector<16x64xf32> -> vector<16x64xf32>
    %177 = vector.broadcast %6 : vector<1x64xf32> to vector<16x64xf32>
    %178 = arith.addf %176, %177 : vector<16x64xf32>
    %cst_59 = arith.constant 0.000000e+00 : f32
    %179 = vector.broadcast %cst_59 : f32 to vector<16x64xf32>
    %180 = arith.maximumf %178, %179 : vector<16x64xf32>
    %cst_60 = arith.constant dense<0.000000e+00> : vector<16x32xf32>
    %181 = tpu.matmul %180, %7, %cst_60 {dimension_numbers = #tpu.dot_dimension_numbers<[1], [0], [0], [1], [0, 0, 1, 1], [], []>} : vector<16x64xf32>, vector<64x32xf32>, vector<16x32xf32> -> vector<16x32xf32>
    %182 = vector.broadcast %8 : vector<1x32xf32> to vector<16x32xf32>
    %183 = arith.addf %181, %182 : vector<16x32xf32>
    %184 = arith.addf %175, %183 : vector<16x32xf32>
    %cst_61 = arith.constant dense<0.000000e+00> : vector<16xf32>
    %185 = vector.multi_reduction <add>, %184, %cst_61 [1] : vector<16x32xf32> to vector<16xf32>
    %186 = vector.shape_cast %185 : vector<16xf32> to vector<16x1xf32>
    %cst_62 = arith.constant 3.200000e+01 : f32
    %187 = vector.broadcast %cst_62 : f32 to vector<16x1xf32>
    %188 = arith.divf %186, %187 : vector<16x1xf32>
    %189 = vector.broadcast %188 : vector<16x1xf32> to vector<16x32xf32>
    %190 = arith.subf %184, %189 : vector<16x32xf32>
    %191 = arith.mulf %190, %190 : vector<16x32xf32>
    %cst_63 = arith.constant dense<0.000000e+00> : vector<16xf32>
    %192 = vector.multi_reduction <add>, %191, %cst_63 [1] : vector<16x32xf32> to vector<16xf32>
    %193 = vector.shape_cast %192 : vector<16xf32> to vector<16x1xf32>
    %cst_64 = arith.constant 3.200000e+01 : f32
    %194 = vector.broadcast %cst_64 : f32 to vector<16x1xf32>
    %195 = arith.divf %193, %194 : vector<16x1xf32>
    %196 = vector.broadcast %188 : vector<16x1xf32> to vector<16x32xf32>
    %197 = arith.subf %184, %196 : vector<16x32xf32>
    %cst_65 = arith.constant 9.99999974E-6 : f32
    %198 = vector.broadcast %cst_65 : f32 to vector<16x1xf32>
    %199 = arith.addf %195, %198 : vector<16x1xf32>
    %200 = math.rsqrt %199 : vector<16x1xf32>
    %201 = vector.broadcast %200 : vector<16x1xf32> to vector<16x32xf32>
    %202 = arith.mulf %197, %201 : vector<16x32xf32>
    %203 = vector.broadcast %11 : vector<1x32xf32> to vector<16x32xf32>
    %204 = arith.mulf %202, %203 : vector<16x32xf32>
    %205 = vector.broadcast %12 : vector<1x32xf32> to vector<16x32xf32>
    %206 = arith.addf %204, %205 : vector<16x32xf32>
    %cst_66 = arith.constant dense<0.000000e+00> : vector<16x4xf32>
    %207 = tpu.matmul %206, %1, %cst_66 {dimension_numbers = #tpu.dot_dimension_numbers<[1], [0], [0], [1], [0, 0, 1, 1], [], []>} : vector<16x32xf32>, vector<32x4xf32>, vector<16x4xf32> -> vector<16x4xf32>
    %cst_67 = arith.constant 8.000000e+00 : f32
    %208 = vector.broadcast %cst_67 : f32 to vector<16x4xf32>
    %209 = arith.mulf %207, %208 : vector<16x4xf32>
    %cst_68 = arith.constant dense<0.000000e+00> : vector<16x4xf32>
    %210 = tpu.matmul %206, %2, %cst_68 {dimension_numbers = #tpu.dot_dimension_numbers<[1], [0], [0], [1], [0, 0, 1, 1], [], []>} : vector<16x32xf32>, vector<32x4xf32>, vector<16x4xf32> -> vector<16x4xf32>
    %cst_69 = arith.constant 0.000000e+00 : f32
    %211 = vector.broadcast %cst_69 : f32 to vector<16x4xf32>
    %212 = arith.maximumf %210, %211 : vector<16x4xf32>
    %213 = math.absf %210 : vector<16x4xf32>
    %cst_70 = arith.constant 0.000000e+00 : f32
    %214 = vector.broadcast %cst_70 : f32 to vector<16x4xf32>
    %215 = arith.subf %214, %213 : vector<16x4xf32>
    %216 = math.exp %215 : vector<16x4xf32>
    %cst_71 = arith.constant 1.000000e+00 : f32
    %217 = vector.broadcast %cst_71 : f32 to vector<16x4xf32>
    %218 = arith.addf %217, %216 : vector<16x4xf32>
    %219 = math.log %218 : vector<16x4xf32>
    %220 = arith.addf %212, %219 : vector<16x4xf32>
    %cst_72 = arith.constant 1.000000e+00 : f32
    %221 = vector.broadcast %cst_72 : f32 to vector<16x4xf32>
    %222 = arith.addf %220, %221 : vector<16x4xf32>
    %223 = arith.mulf %222, %222 : vector<16x4xf32>
    %cst_73 = arith.constant 5.000000e-01 : f32
    %224 = vector.broadcast %cst_73 : f32 to vector<16x4xf32>
    %225 = arith.divf %224, %223 : vector<16x4xf32>
    %cst_74 = arith.constant dense<0.000000e+00> : vector<16x32xf32>
    %226 = tpu.matmul %206, %3, %cst_74 {dimension_numbers = #tpu.dot_dimension_numbers<[1], [0], [0], [1], [0, 0, 1, 1], [], []>} : vector<16x32xf32>, vector<32x32xf32>, vector<16x32xf32> -> vector<16x32xf32>
    %227 = vector.extract_strided_slice %209 {offsets = [0, 0], sizes = [16, 1], strides = [1, 1]} : vector<16x4xf32> to vector<16x1xf32>
    %228 = vector.shape_cast %227 : vector<16x1xf32> to vector<2x8x1xf32>
    %229 = vector.extract_strided_slice %225 {offsets = [0, 0], sizes = [16, 1], strides = [1, 1]} : vector<16x4xf32> to vector<16x1xf32>
    %230 = vector.shape_cast %229 : vector<16x1xf32> to vector<2x8x1xf32>
    %231 = vector.broadcast %17 : vector<1x8x8xf32> to vector<2x8x8xf32>
    %232 = vector.broadcast %228 : vector<2x8x1xf32> to vector<2x8x8xf32>
    %233 = arith.subf %231, %232 : vector<2x8x8xf32>
    %234 = arith.mulf %233, %233 : vector<2x8x8xf32>
    %cst_75 = arith.constant 0.000000e+00 : f32
    %235 = vector.broadcast %cst_75 : f32 to vector<2x8x8xf32>
    %236 = arith.subf %235, %234 : vector<2x8x8xf32>
    %237 = vector.broadcast %230 : vector<2x8x1xf32> to vector<2x8x8xf32>
    %238 = arith.mulf %236, %237 : vector<2x8x8xf32>
    %cst_76 = arith.constant dense<0xFF800000> : vector<2x8xf32>
    %239 = vector.multi_reduction <maximumf>, %238, %cst_76 [2] : vector<2x8x8xf32> to vector<2x8xf32>
    %240 = vector.shape_cast %239 : vector<2x8xf32> to vector<2x8x1xf32>
    %241 = vector.broadcast %240 : vector<2x8x1xf32> to vector<2x8x8xf32>
    %242 = arith.subf %238, %241 : vector<2x8x8xf32>
    %243 = math.exp %242 : vector<2x8x8xf32>
    %cst_77 = arith.constant dense<0.000000e+00> : vector<2x8xf32>
    %244 = vector.multi_reduction <add>, %243, %cst_77 [2] : vector<2x8x8xf32> to vector<2x8xf32>
    %245 = vector.shape_cast %244 : vector<2x8xf32> to vector<2x8x1xf32>
    %246 = tpu.reciprocal %245 {approx = true} : vector<2x8x1xf32> -> vector<2x8x1xf32>
    %247 = vector.broadcast %246 : vector<2x8x1xf32> to vector<2x8x8xf32>
    %248 = arith.mulf %243, %247 : vector<2x8x8xf32>
    %249 = vector.extract_strided_slice %226 {offsets = [0, 0], sizes = [16, 8], strides = [1, 1]} : vector<16x32xf32> to vector<16x8xf32>
    %250 = vector.shape_cast %249 : vector<16x8xf32> to vector<2x8x8xf32>
    "tpu.trace_start"() <{level = 10 : i32, message = "bqm,bmd->bqd"}> : () -> ()
    %cst_78 = arith.constant dense<0.000000e+00> : vector<2x8x8xf32>
    %251 = tpu.matmul %248, %250, %cst_78 {dimension_numbers = #tpu.dot_dimension_numbers<[2], [1], [1], [2], [0, 0, 0, 1, 1, 2], [0], [0]>} : vector<2x8x8xf32>, vector<2x8x8xf32>, vector<2x8x8xf32> -> vector<2x8x8xf32>
    "tpu.trace_stop"() : () -> ()
    %252 = vector.shape_cast %251 : vector<2x8x8xf32> to vector<16x8xf32>
    %253 = vector.extract_strided_slice %4 {offsets = [0, 0], sizes = [8, 32], strides = [1, 1]} : vector<32x32xf32> to vector<8x32xf32>
    %cst_79 = arith.constant dense<0.000000e+00> : vector<16x32xf32>
    %254 = tpu.matmul %252, %253, %cst_79 {dimension_numbers = #tpu.dot_dimension_numbers<[1], [0], [0], [1], [0, 0, 1, 1], [], []>} : vector<16x8xf32>, vector<8x32xf32>, vector<16x32xf32> -> vector<16x32xf32>
    %255 = vector.extract_strided_slice %209 {offsets = [0, 1], sizes = [16, 1], strides = [1, 1]} : vector<16x4xf32> to vector<16x1xf32>
    %256 = vector.shape_cast %255 : vector<16x1xf32> to vector<2x8x1xf32>
    %257 = vector.extract_strided_slice %225 {offsets = [0, 1], sizes = [16, 1], strides = [1, 1]} : vector<16x4xf32> to vector<16x1xf32>
    %258 = vector.shape_cast %257 : vector<16x1xf32> to vector<2x8x1xf32>
    %259 = vector.broadcast %17 : vector<1x8x8xf32> to vector<2x8x8xf32>
    %260 = vector.broadcast %256 : vector<2x8x1xf32> to vector<2x8x8xf32>
    %261 = arith.subf %259, %260 : vector<2x8x8xf32>
    %262 = arith.mulf %261, %261 : vector<2x8x8xf32>
    %cst_80 = arith.constant 0.000000e+00 : f32
    %263 = vector.broadcast %cst_80 : f32 to vector<2x8x8xf32>
    %264 = arith.subf %263, %262 : vector<2x8x8xf32>
    %265 = vector.broadcast %258 : vector<2x8x1xf32> to vector<2x8x8xf32>
    %266 = arith.mulf %264, %265 : vector<2x8x8xf32>
    %cst_81 = arith.constant dense<0xFF800000> : vector<2x8xf32>
    %267 = vector.multi_reduction <maximumf>, %266, %cst_81 [2] : vector<2x8x8xf32> to vector<2x8xf32>
    %268 = vector.shape_cast %267 : vector<2x8xf32> to vector<2x8x1xf32>
    %269 = vector.broadcast %268 : vector<2x8x1xf32> to vector<2x8x8xf32>
    %270 = arith.subf %266, %269 : vector<2x8x8xf32>
    %271 = math.exp %270 : vector<2x8x8xf32>
    %cst_82 = arith.constant dense<0.000000e+00> : vector<2x8xf32>
    %272 = vector.multi_reduction <add>, %271, %cst_82 [2] : vector<2x8x8xf32> to vector<2x8xf32>
    %273 = vector.shape_cast %272 : vector<2x8xf32> to vector<2x8x1xf32>
    %274 = tpu.reciprocal %273 {approx = true} : vector<2x8x1xf32> -> vector<2x8x1xf32>
    %275 = vector.broadcast %274 : vector<2x8x1xf32> to vector<2x8x8xf32>
    %276 = arith.mulf %271, %275 : vector<2x8x8xf32>
    %277 = vector.extract_strided_slice %226 {offsets = [0, 8], sizes = [16, 8], strides = [1, 1]} : vector<16x32xf32> to vector<16x8xf32>
    %278 = vector.shape_cast %277 : vector<16x8xf32> to vector<2x8x8xf32>
    "tpu.trace_start"() <{level = 10 : i32, message = "bqm,bmd->bqd"}> : () -> ()
    %cst_83 = arith.constant dense<0.000000e+00> : vector<2x8x8xf32>
    %279 = tpu.matmul %276, %278, %cst_83 {dimension_numbers = #tpu.dot_dimension_numbers<[2], [1], [1], [2], [0, 0, 0, 1, 1, 2], [0], [0]>} : vector<2x8x8xf32>, vector<2x8x8xf32>, vector<2x8x8xf32> -> vector<2x8x8xf32>
    "tpu.trace_stop"() : () -> ()
    %280 = vector.shape_cast %279 : vector<2x8x8xf32> to vector<16x8xf32>
    %281 = vector.extract_strided_slice %4 {offsets = [8, 0], sizes = [8, 32], strides = [1, 1]} : vector<32x32xf32> to vector<8x32xf32>
    %cst_84 = arith.constant dense<0.000000e+00> : vector<16x32xf32>
    %282 = tpu.matmul %280, %281, %cst_84 {dimension_numbers = #tpu.dot_dimension_numbers<[1], [0], [0], [1], [0, 0, 1, 1], [], []>} : vector<16x8xf32>, vector<8x32xf32>, vector<16x32xf32> -> vector<16x32xf32>
    %283 = arith.addf %254, %282 : vector<16x32xf32>
    %284 = vector.extract_strided_slice %209 {offsets = [0, 2], sizes = [16, 1], strides = [1, 1]} : vector<16x4xf32> to vector<16x1xf32>
    %285 = vector.shape_cast %284 : vector<16x1xf32> to vector<2x8x1xf32>
    %286 = vector.extract_strided_slice %225 {offsets = [0, 2], sizes = [16, 1], strides = [1, 1]} : vector<16x4xf32> to vector<16x1xf32>
    %287 = vector.shape_cast %286 : vector<16x1xf32> to vector<2x8x1xf32>
    %288 = vector.broadcast %17 : vector<1x8x8xf32> to vector<2x8x8xf32>
    %289 = vector.broadcast %285 : vector<2x8x1xf32> to vector<2x8x8xf32>
    %290 = arith.subf %288, %289 : vector<2x8x8xf32>
    %291 = arith.mulf %290, %290 : vector<2x8x8xf32>
    %cst_85 = arith.constant 0.000000e+00 : f32
    %292 = vector.broadcast %cst_85 : f32 to vector<2x8x8xf32>
    %293 = arith.subf %292, %291 : vector<2x8x8xf32>
    %294 = vector.broadcast %287 : vector<2x8x1xf32> to vector<2x8x8xf32>
    %295 = arith.mulf %293, %294 : vector<2x8x8xf32>
    %cst_86 = arith.constant dense<0xFF800000> : vector<2x8xf32>
    %296 = vector.multi_reduction <maximumf>, %295, %cst_86 [2] : vector<2x8x8xf32> to vector<2x8xf32>
    %297 = vector.shape_cast %296 : vector<2x8xf32> to vector<2x8x1xf32>
    %298 = vector.broadcast %297 : vector<2x8x1xf32> to vector<2x8x8xf32>
    %299 = arith.subf %295, %298 : vector<2x8x8xf32>
    %300 = math.exp %299 : vector<2x8x8xf32>
    %cst_87 = arith.constant dense<0.000000e+00> : vector<2x8xf32>
    %301 = vector.multi_reduction <add>, %300, %cst_87 [2] : vector<2x8x8xf32> to vector<2x8xf32>
    %302 = vector.shape_cast %301 : vector<2x8xf32> to vector<2x8x1xf32>
    %303 = tpu.reciprocal %302 {approx = true} : vector<2x8x1xf32> -> vector<2x8x1xf32>
    %304 = vector.broadcast %303 : vector<2x8x1xf32> to vector<2x8x8xf32>
    %305 = arith.mulf %300, %304 : vector<2x8x8xf32>
    %306 = vector.extract_strided_slice %226 {offsets = [0, 16], sizes = [16, 8], strides = [1, 1]} : vector<16x32xf32> to vector<16x8xf32>
    %307 = vector.shape_cast %306 : vector<16x8xf32> to vector<2x8x8xf32>
    "tpu.trace_start"() <{level = 10 : i32, message = "bqm,bmd->bqd"}> : () -> ()
    %cst_88 = arith.constant dense<0.000000e+00> : vector<2x8x8xf32>
    %308 = tpu.matmul %305, %307, %cst_88 {dimension_numbers = #tpu.dot_dimension_numbers<[2], [1], [1], [2], [0, 0, 0, 1, 1, 2], [0], [0]>} : vector<2x8x8xf32>, vector<2x8x8xf32>, vector<2x8x8xf32> -> vector<2x8x8xf32>
    "tpu.trace_stop"() : () -> ()
    %309 = vector.shape_cast %308 : vector<2x8x8xf32> to vector<16x8xf32>
    %310 = vector.extract_strided_slice %4 {offsets = [16, 0], sizes = [8, 32], strides = [1, 1]} : vector<32x32xf32> to vector<8x32xf32>
    %cst_89 = arith.constant dense<0.000000e+00> : vector<16x32xf32>
    %311 = tpu.matmul %309, %310, %cst_89 {dimension_numbers = #tpu.dot_dimension_numbers<[1], [0], [0], [1], [0, 0, 1, 1], [], []>} : vector<16x8xf32>, vector<8x32xf32>, vector<16x32xf32> -> vector<16x32xf32>
    %312 = arith.addf %283, %311 : vector<16x32xf32>
    %313 = vector.extract_strided_slice %209 {offsets = [0, 3], sizes = [16, 1], strides = [1, 1]} : vector<16x4xf32> to vector<16x1xf32>
    %314 = vector.shape_cast %313 : vector<16x1xf32> to vector<2x8x1xf32>
    %315 = vector.extract_strided_slice %225 {offsets = [0, 3], sizes = [16, 1], strides = [1, 1]} : vector<16x4xf32> to vector<16x1xf32>
    %316 = vector.shape_cast %315 : vector<16x1xf32> to vector<2x8x1xf32>
    %317 = vector.broadcast %17 : vector<1x8x8xf32> to vector<2x8x8xf32>
    %318 = vector.broadcast %314 : vector<2x8x1xf32> to vector<2x8x8xf32>
    %319 = arith.subf %317, %318 : vector<2x8x8xf32>
    %320 = arith.mulf %319, %319 : vector<2x8x8xf32>
    %cst_90 = arith.constant 0.000000e+00 : f32
    %321 = vector.broadcast %cst_90 : f32 to vector<2x8x8xf32>
    %322 = arith.subf %321, %320 : vector<2x8x8xf32>
    %323 = vector.broadcast %316 : vector<2x8x1xf32> to vector<2x8x8xf32>
    %324 = arith.mulf %322, %323 : vector<2x8x8xf32>
    %cst_91 = arith.constant dense<0xFF800000> : vector<2x8xf32>
    %325 = vector.multi_reduction <maximumf>, %324, %cst_91 [2] : vector<2x8x8xf32> to vector<2x8xf32>
    %326 = vector.shape_cast %325 : vector<2x8xf32> to vector<2x8x1xf32>
    %327 = vector.broadcast %326 : vector<2x8x1xf32> to vector<2x8x8xf32>
    %328 = arith.subf %324, %327 : vector<2x8x8xf32>
    %329 = math.exp %328 : vector<2x8x8xf32>
    %cst_92 = arith.constant dense<0.000000e+00> : vector<2x8xf32>
    %330 = vector.multi_reduction <add>, %329, %cst_92 [2] : vector<2x8x8xf32> to vector<2x8xf32>
    %331 = vector.shape_cast %330 : vector<2x8xf32> to vector<2x8x1xf32>
    %332 = tpu.reciprocal %331 {approx = true} : vector<2x8x1xf32> -> vector<2x8x1xf32>
    %333 = vector.broadcast %332 : vector<2x8x1xf32> to vector<2x8x8xf32>
    %334 = arith.mulf %329, %333 : vector<2x8x8xf32>
    %335 = vector.extract_strided_slice %226 {offsets = [0, 24], sizes = [16, 8], strides = [1, 1]} : vector<16x32xf32> to vector<16x8xf32>
    %336 = vector.shape_cast %335 : vector<16x8xf32> to vector<2x8x8xf32>
    "tpu.trace_start"() <{level = 10 : i32, message = "bqm,bmd->bqd"}> : () -> ()
    %cst_93 = arith.constant dense<0.000000e+00> : vector<2x8x8xf32>
    %337 = tpu.matmul %334, %336, %cst_93 {dimension_numbers = #tpu.dot_dimension_numbers<[2], [1], [1], [2], [0, 0, 0, 1, 1, 2], [0], [0]>} : vector<2x8x8xf32>, vector<2x8x8xf32>, vector<2x8x8xf32> -> vector<2x8x8xf32>
    "tpu.trace_stop"() : () -> ()
    %338 = vector.shape_cast %337 : vector<2x8x8xf32> to vector<16x8xf32>
    %339 = vector.extract_strided_slice %4 {offsets = [24, 0], sizes = [8, 32], strides = [1, 1]} : vector<32x32xf32> to vector<8x32xf32>
    %cst_94 = arith.constant dense<0.000000e+00> : vector<16x32xf32>
    %340 = tpu.matmul %338, %339, %cst_94 {dimension_numbers = #tpu.dot_dimension_numbers<[1], [0], [0], [1], [0, 0, 1, 1], [], []>} : vector<16x8xf32>, vector<8x32xf32>, vector<16x32xf32> -> vector<16x32xf32>
    %341 = arith.addf %312, %340 : vector<16x32xf32>
    %342 = arith.addf %206, %341 : vector<16x32xf32>
    %cst_95 = arith.constant dense<0.000000e+00> : vector<16xf32>
    %343 = vector.multi_reduction <add>, %342, %cst_95 [1] : vector<16x32xf32> to vector<16xf32>
    %344 = vector.shape_cast %343 : vector<16xf32> to vector<16x1xf32>
    %cst_96 = arith.constant 3.200000e+01 : f32
    %345 = vector.broadcast %cst_96 : f32 to vector<16x1xf32>
    %346 = arith.divf %344, %345 : vector<16x1xf32>
    %347 = vector.broadcast %346 : vector<16x1xf32> to vector<16x32xf32>
    %348 = arith.subf %342, %347 : vector<16x32xf32>
    %349 = arith.mulf %348, %348 : vector<16x32xf32>
    %cst_97 = arith.constant dense<0.000000e+00> : vector<16xf32>
    %350 = vector.multi_reduction <add>, %349, %cst_97 [1] : vector<16x32xf32> to vector<16xf32>
    %351 = vector.shape_cast %350 : vector<16xf32> to vector<16x1xf32>
    %cst_98 = arith.constant 3.200000e+01 : f32
    %352 = vector.broadcast %cst_98 : f32 to vector<16x1xf32>
    %353 = arith.divf %351, %352 : vector<16x1xf32>
    %354 = vector.broadcast %346 : vector<16x1xf32> to vector<16x32xf32>
    %355 = arith.subf %342, %354 : vector<16x32xf32>
    %cst_99 = arith.constant 9.99999974E-6 : f32
    %356 = vector.broadcast %cst_99 : f32 to vector<16x1xf32>
    %357 = arith.addf %353, %356 : vector<16x1xf32>
    %358 = math.rsqrt %357 : vector<16x1xf32>
    %359 = vector.broadcast %358 : vector<16x1xf32> to vector<16x32xf32>
    %360 = arith.mulf %355, %359 : vector<16x32xf32>
    %361 = vector.broadcast %9 : vector<1x32xf32> to vector<16x32xf32>
    %362 = arith.mulf %360, %361 : vector<16x32xf32>
    %363 = vector.broadcast %10 : vector<1x32xf32> to vector<16x32xf32>
    %364 = arith.addf %362, %363 : vector<16x32xf32>
    %cst_100 = arith.constant dense<0.000000e+00> : vector<16x64xf32>
    %365 = tpu.matmul %364, %5, %cst_100 {dimension_numbers = #tpu.dot_dimension_numbers<[1], [0], [0], [1], [0, 0, 1, 1], [], []>} : vector<16x32xf32>, vector<32x64xf32>, vector<16x64xf32> -> vector<16x64xf32>
    %366 = vector.broadcast %6 : vector<1x64xf32> to vector<16x64xf32>
    %367 = arith.addf %365, %366 : vector<16x64xf32>
    %cst_101 = arith.constant 0.000000e+00 : f32
    %368 = vector.broadcast %cst_101 : f32 to vector<16x64xf32>
    %369 = arith.maximumf %367, %368 : vector<16x64xf32>
    %cst_102 = arith.constant dense<0.000000e+00> : vector<16x32xf32>
    %370 = tpu.matmul %369, %7, %cst_102 {dimension_numbers = #tpu.dot_dimension_numbers<[1], [0], [0], [1], [0, 0, 1, 1], [], []>} : vector<16x64xf32>, vector<64x32xf32>, vector<16x32xf32> -> vector<16x32xf32>
    %371 = vector.broadcast %8 : vector<1x32xf32> to vector<16x32xf32>
    %372 = arith.addf %370, %371 : vector<16x32xf32>
    %373 = arith.addf %364, %372 : vector<16x32xf32>
    %cst_103 = arith.constant dense<0.000000e+00> : vector<16xf32>
    %374 = vector.multi_reduction <add>, %373, %cst_103 [1] : vector<16x32xf32> to vector<16xf32>
    %375 = vector.shape_cast %374 : vector<16xf32> to vector<16x1xf32>
    %cst_104 = arith.constant 3.200000e+01 : f32
    %376 = vector.broadcast %cst_104 : f32 to vector<16x1xf32>
    %377 = arith.divf %375, %376 : vector<16x1xf32>
    %378 = vector.broadcast %377 : vector<16x1xf32> to vector<16x32xf32>
    %379 = arith.subf %373, %378 : vector<16x32xf32>
    %380 = arith.mulf %379, %379 : vector<16x32xf32>
    %cst_105 = arith.constant dense<0.000000e+00> : vector<16xf32>
    %381 = vector.multi_reduction <add>, %380, %cst_105 [1] : vector<16x32xf32> to vector<16xf32>
    %382 = vector.shape_cast %381 : vector<16xf32> to vector<16x1xf32>
    %cst_106 = arith.constant 3.200000e+01 : f32
    %383 = vector.broadcast %cst_106 : f32 to vector<16x1xf32>
    %384 = arith.divf %382, %383 : vector<16x1xf32>
    %385 = vector.broadcast %377 : vector<16x1xf32> to vector<16x32xf32>
    %386 = arith.subf %373, %385 : vector<16x32xf32>
    %cst_107 = arith.constant 9.99999974E-6 : f32
    %387 = vector.broadcast %cst_107 : f32 to vector<16x1xf32>
    %388 = arith.addf %384, %387 : vector<16x1xf32>
    %389 = math.rsqrt %388 : vector<16x1xf32>
    %390 = vector.broadcast %389 : vector<16x1xf32> to vector<16x32xf32>
    %391 = arith.mulf %386, %390 : vector<16x32xf32>
    %392 = vector.broadcast %11 : vector<1x32xf32> to vector<16x32xf32>
    %393 = arith.mulf %391, %392 : vector<16x32xf32>
    %394 = vector.broadcast %12 : vector<1x32xf32> to vector<16x32xf32>
    %395 = arith.addf %393, %394 : vector<16x32xf32>
    %c0_108 = arith.constant 0 : index
    %c0_109 = arith.constant 0 : index
    %396 = vector.load %arg13[%c0_108, %c0_109] : memref<32x128xf32, #tpu.memory_space<vmem>>, vector<32x128xf32>
    %cst_110 = arith.constant dense<0.000000e+00> : vector<16x128xf32>
    %397 = tpu.matmul %395, %396, %cst_110 {dimension_numbers = #tpu.dot_dimension_numbers<[1], [0], [0], [1], [0, 0, 1, 1], [], []>} : vector<16x32xf32>, vector<32x128xf32>, vector<16x128xf32> -> vector<16x128xf32>
    %c0_111 = arith.constant 0 : index
    %c0_112 = arith.constant 0 : index
    %398 = vector.load %arg14[%c0_111, %c0_112] : memref<1x128xf32, #tpu.memory_space<vmem>>, vector<1x128xf32>
    %399 = vector.broadcast %398 : vector<1x128xf32> to vector<16x128xf32>
    %400 = arith.addf %397, %399 : vector<16x128xf32>
    %cst_113 = arith.constant dense<0xFF800000> : vector<16xf32>
    %401 = vector.multi_reduction <maximumf>, %400, %cst_113 [1] : vector<16x128xf32> to vector<16xf32>
    %402 = vector.shape_cast %401 : vector<16xf32> to vector<16x1xf32>
    %403 = vector.broadcast %402 : vector<16x1xf32> to vector<16x128xf32>
    %404 = arith.subf %400, %403 : vector<16x128xf32>
    %405 = math.exp %404 : vector<16x128xf32>
    %cst_114 = arith.constant dense<0.000000e+00> : vector<16xf32>
    %406 = vector.multi_reduction <add>, %405, %cst_114 [1] : vector<16x128xf32> to vector<16xf32>
    %407 = vector.shape_cast %406 : vector<16xf32> to vector<16x1xf32>
    %408 = math.log %407 : vector<16x1xf32>
    %409 = vector.broadcast %408 : vector<16x1xf32> to vector<16x128xf32>
    %410 = arith.subf %404, %409 : vector<16x128xf32>
    %c0_115 = arith.constant 0 : index
    %c0_116 = arith.constant 0 : index
    %411 = vector.load %arg15[%c0_115, %c0_116] : memref<16x128xf32, #tpu.memory_space<vmem>>, vector<16x128xf32>
    tpu.vector_store %arg15[%c0_115, %c0_116], %410 {strides = array<i32>} : memref<16x128xf32, #tpu.memory_space<vmem>>, vector<16x128xf32>,
    return
  }
}

</mosaic_0001>

<llo_original>
// kernel: forward.1
$region0: #{forward.1}
  #allocation0 [shape = 'u32[]', space=smem, size = 0x4, offset = 0x4, fixed_abs, tag = 'smem constant byte address 0x4 - core index']
  #allocation1 [shape = 'u32[72,128]{1,0:T(1,128)}', space=vmem, size = 0x9000, scoped, tag = 'internal scratch']
  %s0 = inlined_call_operand.hbm [shape: f32[16,32], index: 0, kind: input, shape index: {}]
  %s1 = inlined_call_operand.vmem [shape: f32[32,4], index: 1, kind: input, shape index: {}]
  %s2 = inlined_call_operand.vmem [shape: f32[32,4], index: 2, kind: input, shape index: {}]
  %s3 = inlined_call_operand.vmem [shape: f32[32,32], index: 3, kind: input, shape index: {}]
  %s4 = inlined_call_operand.vmem [shape: f32[32,32], index: 4, kind: input, shape index: {}]
  %s5 = inlined_call_operand.vmem [shape: f32[32,64], index: 5, kind: input, shape index: {}]
  %s6 = inlined_call_operand.vmem [shape: f32[1,64], index: 6, kind: input, shape index: {}]
  %s7 = inlined_call_operand.vmem [shape: f32[64,32], index: 7, kind: input, shape index: {}]
  %s8 = inlined_call_operand.vmem [shape: f32[1,32], index: 8, kind: input, shape index: {}]
  %s9 = inlined_call_operand.vmem [shape: f32[1,32], index: 9, kind: input, shape index: {}]
  %s10 = inlined_call_operand.vmem [shape: f32[1,32], index: 10, kind: input, shape index: {}]
  %s11 = inlined_call_operand.vmem [shape: f32[1,32], index: 11, kind: input, shape index: {}]
  %s12 = inlined_call_operand.vmem [shape: f32[1,32], index: 12, kind: input, shape index: {}]
  %s13 = inlined_call_operand.vmem [shape: f32[32,128], index: 13, kind: input, shape index: {}]
  %s14 = inlined_call_operand.vmem [shape: f32[1,128], index: 14, kind: input, shape index: {}]
  %s15 = inlined_call_operand.vmem [shape: f32[16,128], index: 15, kind: output, shape index: {}]
  %s16 = sld [smem:[#allocation0]]
  $region74: #{forward.1} parent=0
    _
  %s18 = ssub.s32 1, %s16
  %s19 = scalar_select 0, %s18, %s16
  $region1: #{forward.1} parent=0
    #allocation2 [shape = 'u8[8192]{0}', space=vmem, size = 0x2000, scoped, tag = 'input window, operand 0, single buffered']
    #allocation3 [shape = 's32[1]{0}', space=sflag, size = 0x4, scoped, tag = 'scoped memory for forward.1']
    %20 = vsyncpa [#allocation3], 0
    // Predicated region
    $region2: #{forward.1} parent=1 // pred_check
      _
    $region3: #{forward.1} parent=1 // pred_check_branch
      %22 = sbr.rel (0) target = $region5
    $region4: #{forward.1} parent=1 // pred_region
      %24 = vsyncadd [#allocation3], 0
      %s25 = sshll.u32 %s0, 4
      %s26 = int_to_ptr.hbm [resolvable:$true] %s25
      %s27 = sshll.u32 [#allocation2], 4
      %s28 = int_to_ptr.vmem [resolvable:$true] %s27
      %33 = dma.hbm_to_vmem [thread:$0]  %s26, 256, %s28, [#allocation3], 128, 128, 8
    $region5: #{forward.1} parent=1 // pred_fallthru
      _
    // Predicated region
    $region6: #{forward.1} parent=1 // pred_check
      _
    $region7: #{forward.1} parent=1 // pred_check_branch
      %35 = sbr.rel (0) target = $region9
    $region8: #{forward.1} parent=1 // pred_region
      _
    $region9: #{forward.1} parent=1 // pred_fallthru
      _
    // Predicated region
    $region10: #{forward.1} parent=1 // pred_check
      _
    $region11: #{forward.1} parent=1 // pred_check_branch
      %37 = sbr.rel (0) target = $region13
    $region12: #{forward.1} parent=1 // pred_region
      _
    $region13: #{forward.1} parent=1 // pred_fallthru
      _
    // Predicated region
    $region14: #{forward.1} parent=1 // pred_check
      _
    $region15: #{forward.1} parent=1 // pred_check_branch
      %39 = sbr.rel (0) target = $region17
    $region16: #{forward.1} parent=1 // pred_region
      _
    $region17: #{forward.1} parent=1 // pred_fallthru
      _
    // Predicated region
    $region18: #{forward.1} parent=1 // pred_check
      _
    $region19: #{forward.1} parent=1 // pred_check_branch
      %41 = sbr.rel (0) target = $region21
    $region20: #{forward.1} parent=1 // pred_region
      _
    $region21: #{forward.1} parent=1 // pred_fallthru
      _
    // Predicated region
    $region22: #{forward.1} parent=1 // pred_check
      _
    $region23: #{forward.1} parent=1 // pred_check_branch
      %43 = sbr.rel (0) target = $region25
    $region24: #{forward.1} parent=1 // pred_region
      _
    $region25: #{forward.1} parent=1 // pred_fallthru
      _
    // Predicated region
    $region26: #{forward.1} parent=1 // pred_check
      _
    $region27: #{forward.1} parent=1 // pred_check_branch
      %45 = sbr.rel (0) target = $region29
    $region28: #{forward.1} parent=1 // pred_region
      _
    $region29: #{forward.1} parent=1 // pred_fallthru
      _
    // Predicated region
    $region30: #{forward.1} parent=1 // pred_check
      _
    $region31: #{forward.1} parent=1 // pred_check_branch
      %47 = sbr.rel (0) target = $region33
    $region32: #{forward.1} parent=1 // pred_region
      _
    $region33: #{forward.1} parent=1 // pred_fallthru
      _
    // Predicated region
    $region34: #{forward.1} parent=1 // pred_check
      _
    $region35: #{forward.1} parent=1 // pred_check_branch
      %49 = sbr.rel (0) target = $region37
    $region36: #{forward.1} parent=1 // pred_region
      _
    $region37: #{forward.1} parent=1 // pred_fallthru
      _
    // Predicated region
    $region38: #{forward.1} parent=1 // pred_check
      _
    $region39: #{forward.1} parent=1 // pred_check_branch
      %51 = sbr.rel (0) target = $region41
    $region40: #{forward.1} parent=1 // pred_region
      _
    $region41: #{forward.1} parent=1 // pred_fallthru
      _
    // Predicated region
    $region42: #{forward.1} parent=1 // pred_check
      _
    $region43: #{forward.1} parent=1 // pred_check_branch
      %53 = sbr.rel (0) target = $region45
    $region44: #{forward.1} parent=1 // pred_region
      _
    $region45: #{forward.1} parent=1 // pred_fallthru
      _
    // Predicated region
    $region46: #{forward.1} parent=1 // pred_check
      _
    $region47: #{forward.1} parent=1 // pred_check_branch
      %55 = sbr.rel (0) target = $region49
    $region48: #{forward.1} parent=1 // pred_region
      _
    $region49: #{forward.1} parent=1 // pred_fallthru
      _
    // Predicated region
    $region50: #{forward.1} parent=1 // pred_check
      _
    $region51: #{forward.1} parent=1 // pred_check_branch
      %57 = sbr.rel (0) target = $region53
    $region52: #{forward.1} parent=1 // pred_region
      _
    $region53: #{forward.1} parent=1 // pred_fallthru
      _
    // Predicated region
    $region54: #{forward.1} parent=1 // pred_check
      _
    $region55: #{forward.1} parent=1 // pred_check_branch
      %59 = sbr.rel (0) target = $region57
    $region56: #{forward.1} parent=1 // pred_region
      _
    $region57: #{forward.1} parent=1 // pred_fallthru
      _
    // Predicated region
    $region58: #{forward.1} parent=1 // pred_check
      _
    $region59: #{forward.1} parent=1 // pred_check_branch
      %61 = sbr.rel (0) target = $region61
    $region60: #{forward.1} parent=1 // pred_region
      _
    $region61: #{forward.1} parent=1 // pred_fallthru
      _
    // Predicated region
    $region62: #{forward.1} parent=1 // pred_check
      _
    $region63: #{forward.1} parent=1 // pred_check_branch
      %63 = sbr.rel (0) target = $region65
    $region64: #{forward.1} parent=1 // pred_region
      %65 = dma.done [#allocation3], 256
    $region65: #{forward.1} parent=1 // pred_fallthru
      _
    %v66 = vld [vmem:[#allocation2] sm:$0xff]
    %v67 = vld [vmem:[#allocation2 + $0x8] sm:$0xff]
    %v68 = vld [vmem:[%s1] sm:$0xff]
    %v69 = vld [vmem:[%s1 + $0x8] sm:$0xff]
    %v70 = vld [vmem:[%s1 + $0x10] sm:$0xff]
    %v71 = vld [vmem:[%s1 + $0x18] sm:$0xff]
    %v72 = vld [vmem:[%s2] sm:$0xff]
    %v73 = vld [vmem:[%s2 + $0x8] sm:$0xff]
    %v74 = vld [vmem:[%s2 + $0x10] sm:$0xff]
    %v75 = vld [vmem:[%s2 + $0x18] sm:$0xff]
    %v76 = vld [vmem:[%s3] sm:$0xff]
    %v77 = vld [vmem:[%s3 + $0x8] sm:$0xff]
    %v78 = vld [vmem:[%s3 + $0x10] sm:$0xff]
    %v79 = vld [vmem:[%s3 + $0x18] sm:$0xff]
    %v80 = vld [vmem:[%s4] sm:$0xff]
    %v81 = vld [vmem:[%s4 + $0x8] sm:$0xff]
    %v82 = vld [vmem:[%s4 + $0x10] sm:$0xff]
    %v83 = vld [vmem:[%s4 + $0x18] sm:$0xff]
    %v84 = vld [vmem:[%s5] sm:$0xff]
    %v85 = vld [vmem:[%s5 + $0x8] sm:$0xff]
    %v86 = vld [vmem:[%s5 + $0x10] sm:$0xff]
    %v87 = vld [vmem:[%s5 + $0x18] sm:$0xff]
    %v88 = vld [vmem:[%s6] sm:$0x1]
    %v89 = vld [vmem:[%s7] sm:$0xff]
    %v90 = vld [vmem:[%s7 + $0x8] sm:$0xff]
    %v91 = vld [vmem:[%s7 + $0x10] sm:$0xff]
    %v92 = vld [vmem:[%s7 + $0x18] sm:$0xff]
    %v93 = vld [vmem:[%s7 + $0x20] sm:$0xff]
    %v94 = vld [vmem:[%s7 + $0x28] sm:$0xff]
    %v95 = vld [vmem:[%s7 + $0x30] sm:$0xff]
    %v96 = vld [vmem:[%s7 + $0x38] sm:$0xff]
    %v97 = vld [vmem:[%s8] sm:$0x1]
    %v98 = vld [vmem:[%s9] sm:$0x1]
    %v99 = vld [vmem:[%s10] sm:$0x1]
    %v100 = vld [vmem:[%s11] sm:$0x1]
    %v101 = vld [vmem:[%s12] sm:$0x1]
    %v102 = vlaneseq
    %v103 = vand.u32 %v102, 127
    %v104 = vcvt.s32.f32 %v103
    %v105 = vlaneseq
    %v106 = vshrl.u32 %v105, 7
    %v107 = vcvt.s32.f32 %v106
    %v108 = vsub.f32 %v104, %v107
    %vm109 = vcmask 261120
    %v111 = vsel %vm109, %v66, 0
    %v114 = vsel %vm109, %v67, 0
    %116 = vmatpush.msra.mxu0 0.0
    %117 = vmatpush.msra.mxu0 0.0
    %118 = vmatpush.msra.mxu0 0.0
    %119 = vmatpush.msra.mxu0 0.0
    %120 = vmatpush.msra.mxu0 0.0
    %121 = vmatpush.msra.mxu0 0.0
    %122 = vmatpush.msra.mxu0 0.0
    %123 = vmatpush.msra.mxu0 0.0
    %124 = vmatpush.msra.mxu0 0.0
    %125 = vmatpush.msra.mxu0 0.0
    %126 = vmatpush.msra.mxu0 0.0
    %127 = vmatpush.msra.mxu0 0.0
    %128 = vmatpush.msra.mxu0 %v71
    %129 = vmatpush.msra.mxu0 %v70
    %130 = vmatpush.msra.mxu0 %v69
    %131 = vmatpush.msra.mxu0 %v68
    %132 = vmatmul.f32.gmra.mxu0 %v111
    %v133 = vpop.f32.mrf.mxu0
    %v134 = vadd.f32 0.0, %v133
    %135 = vmatmul.f32.gmra.mxu0 %v114
    %v136 = vpop.f32.mrf.mxu0
    %v137 = vadd.f32 0.0, %v136
    %138 = vdwg.mxu0
    %v139 = vmul.f32 %v134, 8.0
    %v140 = vmul.f32 %v137, 8.0
    %141 = vmatpush.msra.mxu0 0.0
    %142 = vmatpush.msra.mxu0 0.0
    %143 = vmatpush.msra.mxu0 0.0
    %144 = vmatpush.msra.mxu0 0.0
    %145 = vmatpush.msra.mxu0 0.0
    %146 = vmatpush.msra.mxu0 0.0
    %147 = vmatpush.msra.mxu0 0.0
    %148 = vmatpush.msra.mxu0 0.0
    %149 = vmatpush.msra.mxu0 0.0
    %150 = vmatpush.msra.mxu0 0.0
    %151 = vmatpush.msra.mxu0 0.0
    %152 = vmatpush.msra.mxu0 0.0
    %153 = vmatpush.msra.mxu0 %v75
    %154 = vmatpush.msra.mxu0 %v74
    %155 = vmatpush.msra.mxu0 %v73
    %156 = vmatpush.msra.mxu0 %v72
    %157 = vmatmul.f32.gmra.mxu0 %v111
    %v158 = vpop.f32.mrf.mxu0
    %v159 = vadd.f32 0.0, %v158
    %160 = vmatmul.f32.gmra.mxu0 %v114
    %v161 = vpop.f32.mrf.mxu0
    %v162 = vadd.f32 0.0, %v161
    %163 = vdwg.mxu0
    %v164 = vmax.f32 %v159, 0.0
    %v165 = vmax.f32 %v162, 0.0
    %v166 = vand.u32 2147483647, %v159
    %v167 = vand.u32 2147483647, %v162
    %v168 = vsub.f32 0.0, %v166
    %v169 = vsub.f32 0.0, %v167
    %v170 = vmul.f32 %v168, 1.442695
    %v171 = vpow.pop %v170
    %v172 = vmul.f32 %v169, 1.442695
    %v173 = vpow.pop %v172
    %v174 = vadd.f32 %v171, 1.0
    %v175 = vadd.f32 %v173, 1.0
    %v176 = vlog2.pop %v174
    %v177 = vmul.f32 %v176, 0.6931472
    %v178 = vlog2.pop %v175
    %v179 = vmul.f32 %v178, 0.6931472
    %v180 = vadd.f32 %v164, %v177
    %v181 = vadd.f32 %v165, %v179
    %v182 = vadd.f32 %v180, 1.0
    %v183 = vadd.f32 %v181, 1.0
    %v184 = vmul.f32 %v182, %v182
    %v185 = vmul.f32 %v183, %v183
    %v186 = vrcp.pop %v184
    %v187 = vmul.f32 %v184, %v186
    %v188 = vsub.f32 1.0, %v187
    %v189 = vmul.f32 %v186, %v188
    %v190 = vadd.f32 %v186, %v189
    %vm191 = vweird.f32 %v184
    %vm192 = vweird.f32 %v186
    %vm193 = vmor %vm191, %vm192
    %v194 = vsel %vm193, %v186, %v190
    %v195 = vand.u32 2147483647, %v184
    %vm196 = vcmp.eq.f32.partialorder %v195, 8.507059e+37
    %v197 = vand.u32 %v184, 2147483648
    %v198 = vor.u32 1.1754944e-38, %v197
    %v199 = vsel %vm196, %v198, %v194
    %v200 = vmul.f32 0.5, %v199
    %v201 = vrcp.pop %v185
    %v202 = vmul.f32 %v185, %v201
    %v203 = vsub.f32 1.0, %v202
    %v204 = vmul.f32 %v201, %v203
    %v205 = vadd.f32 %v201, %v204
    %vm206 = vweird.f32 %v185
    %vm207 = vweird.f32 %v201
    %vm208 = vmor %vm206, %vm207
    %v209 = vsel %vm208, %v201, %v205
    %v210 = vand.u32 2147483647, %v185
    %vm211 = vcmp.eq.f32.partialorder %v210, 8.507059e+37
    %v212 = vand.u32 %v185, 2147483648
    %v213 = vor.u32 1.1754944e-38, %v212
    %v214 = vsel %vm211, %v213, %v209
    %v215 = vmul.f32 0.5, %v214
    %216 = vmatpush.msra.mxu0 0.0
    %217 = vmatpush.msra.mxu0 0.0
    %218 = vmatpush.msra.mxu0 0.0
    %219 = vmatpush.msra.mxu0 0.0
    %220 = vmatpush.msra.mxu0 0.0
    %221 = vmatpush.msra.mxu0 0.0
    %222 = vmatpush.msra.mxu0 0.0
    %223 = vmatpush.msra.mxu0 0.0
    %224 = vmatpush.msra.mxu0 0.0
    %225 = vmatpush.msra.mxu0 0.0
    %226 = vmatpush.msra.mxu0 0.0
    %227 = vmatpush.msra.mxu0 0.0
    %228 = vmatpush.msra.mxu0 %v79
    %229 = vmatpush.msra.mxu0 %v78
    %230 = vmatpush.msra.mxu0 %v77
    %231 = vmatpush.msra.mxu0 %v76
    %232 = vmatmul.f32.gmra.mxu0 %v111
    %v233 = vpop.f32.mrf.mxu0
    %v234 = vadd.f32 0.0, %v233
    %235 = vmatmul.f32.gmra.mxu0 %v114
    %v236 = vpop.f32.mrf.mxu0
    %v237 = vadd.f32 0.0, %v236
    %238 = vdwg.mxu0
    %240 = vset.pattern.permute.xlu0 0
    %241 = vperm.xlu0 %240, %v139
    %v242 = vpop.permute.xlu0 %241
    %245 = vset.pattern.permute.xlu0 0
    %246 = vperm.xlu0 %245, %v140
    %v247 = vpop.permute.xlu0 %246
    %v249 = vsub.f32 %v108, %v242
    %v250 = vsub.f32 %v108, %v247
    %v251 = vmul.f32 %v249, %v249
    %v252 = vmul.f32 %v250, %v250
    %v253 = vsub.f32 0.0, %v251
    %v254 = vsub.f32 0.0, %v252
    %256 = vset.pattern.permute.xlu0 0
    %257 = vperm.xlu0 %256, %v200
    %v258 = vpop.permute.xlu0 %257
    %261 = vset.pattern.permute.xlu0 0
    %262 = vperm.xlu0 %261, %v215
    %v263 = vpop.permute.xlu0 %262
    %v265 = vmul.f32 %v253, %v258
    %v266 = vmul.f32 %v254, %v263
    %vm267 = vcmask 64512
    %v268 = vsel %vm267, %v265, -inf
    %269 = vmax.xlane.f32.xlu0 %v268
    %v270 = vpop.xlane.xlu0 %269
    %v271 = vsel %vm267, %v266, -inf
    %272 = vmax.xlane.f32.xlu0 %v271
    %v273 = vpop.xlane.xlu0 %272
    %v274 = vsub.f32 %v265, %v270
    %v275 = vsub.f32 %v266, %v273
    %v276 = vmul.f32 %v274, 1.442695
    %v277 = vpow.pop %v276
    %v278 = vmul.f32 %v275, 1.442695
    %v279 = vpow.pop %v278
    %v280 = vsel %vm267, %v277, 0.0
    %281 = vadd.xlane.f32.xlu0 %v280
    %v282 = vpop.xlane.xlu0 %281
    %v283 = vsel %vm267, %v279, 0.0
    %284 = vadd.xlane.f32.xlu0 %v283
    %v285 = vpop.xlane.xlu0 %284
    %v286 = vrcp.pop %v282
    %v287 = vrcp.pop %v285
    %v288 = vmul.f32 %v277, %v286
    %v289 = vmul.f32 %v279, %v287
    %v291 = vsel %vm267, %v288, 0
    %293 = vmatpush.msra.mxu0 0.0
    %294 = vmatpush.msra.mxu0 0.0
    %295 = vmatpush.msra.mxu0 0.0
    %296 = vmatpush.msra.mxu0 0.0
    %297 = vmatpush.msra.mxu0 0.0
    %298 = vmatpush.msra.mxu0 0.0
    %299 = vmatpush.msra.mxu0 0.0
    %300 = vmatpush.msra.mxu0 0.0
    %301 = vmatpush.msra.mxu0 0.0
    %302 = vmatpush.msra.mxu0 0.0
    %303 = vmatpush.msra.mxu0 0.0
    %304 = vmatpush.msra.mxu0 0.0
    %305 = vmatpush.msra.mxu0 0.0
    %306 = vmatpush.msra.mxu0 0.0
    %307 = vmatpush.msra.mxu0 0.0
    %308 = vmatpush.msra.mxu0 %v234
    %309 = vmatmul.f32.gmra.mxu0 %v291
    %v310 = vpop.f32.mrf.mxu0
    %v311 = vadd.f32 0.0, %v310
    %312 = vdwg.mxu0
    %v314 = vsel %vm267, %v289, 0
    %316 = vmatpush.msra.mxu0 0.0
    %317 = vmatpush.msra.mxu0 0.0
    %318 = vmatpush.msra.mxu0 0.0
    %319 = vmatpush.msra.mxu0 0.0
    %320 = vmatpush.msra.mxu0 0.0
    %321 = vmatpush.msra.mxu0 0.0
    %322 = vmatpush.msra.mxu0 0.0
    %323 = vmatpush.msra.mxu0 0.0
    %324 = vmatpush.msra.mxu0 0.0
    %325 = vmatpush.msra.mxu0 0.0
    %326 = vmatpush.msra.mxu0 0.0
    %327 = vmatpush.msra.mxu0 0.0
    %328 = vmatpush.msra.mxu0 0.0
    %329 = vmatpush.msra.mxu0 0.0
    %330 = vmatpush.msra.mxu0 0.0
    %331 = vmatpush.msra.mxu0 %v237
    %332 = vmatmul.f32.gmra.mxu0 %v314
    %v333 = vpop.f32.mrf.mxu0
    %v334 = vadd.f32 0.0, %v333
    %335 = vdwg.mxu0
    %336 = vset.pattern.permute.xlu0 1
    %337 = vperm.xlu0 %336, %v139
    %v338 = vpop.permute.xlu0 %337
    %340 = vset.pattern.permute.xlu0 1
    %341 = vperm.xlu0 %340, %v140
    %v342 = vpop.permute.xlu0 %341
    %v344 = vsub.f32 %v108, %v338
    %v345 = vsub.f32 %v108, %v342
    %v346 = vmul.f32 %v344, %v344
    %v347 = vmul.f32 %v345, %v345
    %v348 = vsub.f32 0.0, %v346
    %v349 = vsub.f32 0.0, %v347
    %350 = vset.pattern.permute.xlu0 1
    %351 = vperm.xlu0 %350, %v200
    %v352 = vpop.permute.xlu0 %351
    %354 = vset.pattern.permute.xlu0 1
    %355 = vperm.xlu0 %354, %v215
    %v356 = vpop.permute.xlu0 %355
    %v358 = vmul.f32 %v348, %v352
    %v359 = vmul.f32 %v349, %v356
    %v360 = vsel %vm267, %v358, -inf
    %361 = vmax.xlane.f32.xlu0 %v360
    %v362 = vpop.xlane.xlu0 %361
    %v363 = vsel %vm267, %v359, -inf
    %364 = vmax.xlane.f32.xlu0 %v363
    %v365 = vpop.xlane.xlu0 %364
    %v366 = vsub.f32 %v358, %v362
    %v367 = vsub.f32 %v359, %v365
    %v368 = vmul.f32 %v366, 1.442695
    %v369 = vpow.pop %v368
    %v370 = vmul.f32 %v367, 1.442695
    %v371 = vpow.pop %v370
    %v372 = vsel %vm267, %v369, 0.0
    %373 = vadd.xlane.f32.xlu0 %v372
    %v374 = vpop.xlane.xlu0 %373
    %v375 = vsel %vm267, %v371, 0.0
    %376 = vadd.xlane.f32.xlu0 %v375
    %v377 = vpop.xlane.xlu0 %376
    %v378 = vrcp.pop %v374
    %v379 = vrcp.pop %v377
    %v380 = vmul.f32 %v369, %v378
    %v381 = vmul.f32 %v371, %v379
    %383 = vrot.lane.b32.xlu0 %v234, 120
    %v384 = vpop.permute.xlu0 %383
    %v387 = vsel %vm267, %v380, 0
    %389 = vmatpush.msra.mxu0 0.0
    %390 = vmatpush.msra.mxu0 0.0
    %391 = vmatpush.msra.mxu0 0.0
    %392 = vmatpush.msra.mxu0 0.0
    %393 = vmatpush.msra.mxu0 0.0
    %394 = vmatpush.msra.mxu0 0.0
    %395 = vmatpush.msra.mxu0 0.0
    %396 = vmatpush.msra.mxu0 0.0
    %397 = vmatpush.msra.mxu0 0.0
    %398 = vmatpush.msra.mxu0 0.0
    %399 = vmatpush.msra.mxu0 0.0
    %400 = vmatpush.msra.mxu0 0.0
    %401 = vmatpush.msra.mxu0 0.0
    %402 = vmatpush.msra.mxu0 0.0
    %403 = vmatpush.msra.mxu0 0.0
    %404 = vmatpush.msra.mxu0 %v384
    %405 = vmatmul.f32.gmra.mxu0 %v387
    %v406 = vpop.f32.mrf.mxu0
    %v407 = vadd.f32 0.0, %v406
    %408 = vdwg.mxu0
    %410 = vrot.lane.b32.xlu0 %v237, 120
    %v411 = vpop.permute.xlu0 %410
    %v414 = vsel %vm267, %v381, 0
    %416 = vmatpush.msra.mxu0 0.0
    %417 = vmatpush.msra.mxu0 0.0
    %418 = vmatpush.msra.mxu0 0.0
    %419 = vmatpush.msra.mxu0 0.0
    %420 = vmatpush.msra.mxu0 0.0
    %421 = vmatpush.msra.mxu0 0.0
    %422 = vmatpush.msra.mxu0 0.0
    %423 = vmatpush.msra.mxu0 0.0
    %424 = vmatpush.msra.mxu0 0.0
    %425 = vmatpush.msra.mxu0 0.0
    %426 = vmatpush.msra.mxu0 0.0
    %427 = vmatpush.msra.mxu0 0.0
    %428 = vmatpush.msra.mxu0 0.0
    %429 = vmatpush.msra.mxu0 0.0
    %430 = vmatpush.msra.mxu0 0.0
    %431 = vmatpush.msra.mxu0 %v411
    %432 = vmatmul.f32.gmra.mxu0 %v414
    %v433 = vpop.f32.mrf.mxu0
    %v434 = vadd.f32 0.0, %v433
    %435 = vdwg.mxu0
    %v437 = vsel %vm267, %v407, 0
    %v440 = vsel %vm267, %v434, 0
    %442 = vmatpush.msra.mxu0 0.0
    %443 = vmatpush.msra.mxu0 0.0
    %444 = vmatpush.msra.mxu0 0.0
    %445 = vmatpush.msra.mxu0 0.0
    %446 = vmatpush.msra.mxu0 0.0
    %447 = vmatpush.msra.mxu0 0.0
    %448 = vmatpush.msra.mxu0 0.0
    %449 = vmatpush.msra.mxu0 0.0
    %450 = vmatpush.msra.mxu0 0.0
    %451 = vmatpush.msra.mxu0 0.0
    %452 = vmatpush.msra.mxu0 0.0
    %453 = vmatpush.msra.mxu0 0.0
    %454 = vmatpush.msra.mxu0 0.0
    %455 = vmatpush.msra.mxu0 0.0
    %456 = vmatpush.msra.mxu0 0.0
    %457 = vmatpush.msra.mxu0 %v81
    %458 = vmatmul.f32.gmra.mxu0 %v437
    %v459 = vpop.f32.mrf.mxu0
    %v460 = vadd.f32 0.0, %v459
    %461 = vmatmul.f32.gmra.mxu0 %v440
    %v462 = vpop.f32.mrf.mxu0
    %v463 = vadd.f32 0.0, %v462
    %464 = vdwg.mxu0
    %v466 = vsel %vm267, %v311, 0
    %v469 = vsel %vm267, %v334, 0
    %471 = vmatpush.msra.mxu0 0.0
    %472 = vmatpush.msra.mxu0 0.0
    %473 = vmatpush.msra.mxu0 0.0
    %474 = vmatpush.msra.mxu0 0.0
    %475 = vmatpush.msra.mxu0 0.0
    %476 = vmatpush.msra.mxu0 0.0
    %477 = vmatpush.msra.mxu0 0.0
    %478 = vmatpush.msra.mxu0 0.0
    %479 = vmatpush.msra.mxu0 0.0
    %480 = vmatpush.msra.mxu0 0.0
    %481 = vmatpush.msra.mxu0 0.0
    %482 = vmatpush.msra.mxu0 0.0
    %483 = vmatpush.msra.mxu0 0.0
    %484 = vmatpush.msra.mxu0 0.0
    %485 = vmatpush.msra.mxu0 0.0
    %486 = vmatpush.msra.mxu0 %v80
    %487 = vmatmul.f32.gmra.mxu0 %v466
    %v488 = vpop.f32.mrf.mxu0
    %v489 = vadd.f32 %v460, %v488
    %490 = vmatmul.f32.gmra.mxu0 %v469
    %v491 = vpop.f32.mrf.mxu0
    %v492 = vadd.f32 %v463, %v491
    %493 = vdwg.mxu0
    %494 = vset.pattern.permute.xlu0 2
    %495 = vperm.xlu0 %494, %v139
    %v496 = vpop.permute.xlu0 %495
    %498 = vset.pattern.permute.xlu0 2
    %499 = vperm.xlu0 %498, %v140
    %v500 = vpop.permute.xlu0 %499
    %v502 = vsub.f32 %v108, %v496
    %v503 = vsub.f32 %v108, %v500
    %v504 = vmul.f32 %v502, %v502
    %v505 = vmul.f32 %v503, %v503
    %v506 = vsub.f32 0.0, %v504
    %v507 = vsub.f32 0.0, %v505
    %508 = vset.pattern.permute.xlu0 2
    %509 = vperm.xlu0 %508, %v200
    %v510 = vpop.permute.xlu0 %509
    %512 = vset.pattern.permute.xlu0 2
    %513 = vperm.xlu0 %512, %v215
    %v514 = vpop.permute.xlu0 %513
    %v516 = vmul.f32 %v506, %v510
    %v517 = vmul.f32 %v507, %v514
    %v518 = vsel %vm267, %v516, -inf
    %519 = vmax.xlane.f32.xlu0 %v518
    %v520 = vpop.xlane.xlu0 %519
    %v521 = vsel %vm267, %v517, -inf
    %522 = vmax.xlane.f32.xlu0 %v521
    %v523 = vpop.xlane.xlu0 %522
    %v524 = vsub.f32 %v516, %v520
    %v525 = vsub.f32 %v517, %v523
    %v526 = vmul.f32 %v524, 1.442695
    %v527 = vpow.pop %v526
    %v528 = vmul.f32 %v525, 1.442695
    %v529 = vpow.pop %v528
    %v530 = vsel %vm267, %v527, 0.0
    %531 = vadd.xlane.f32.xlu0 %v530
    %v532 = vpop.xlane.xlu0 %531
    %v533 = vsel %vm267, %v529, 0.0
    %534 = vadd.xlane.f32.xlu0 %v533
    %v535 = vpop.xlane.xlu0 %534
    %v536 = vrcp.pop %v532
    %v537 = vrcp.pop %v535
    %v538 = vmul.f32 %v527, %v536
    %v539 = vmul.f32 %v529, %v537
    %540 = vrot.lane.b32.xlu0 %v234, 112
    %v541 = vpop.permute.xlu0 %540
    %v544 = vsel %vm267, %v538, 0
    %546 = vmatpush.msra.mxu0 0.0
    %547 = vmatpush.msra.mxu0 0.0
    %548 = vmatpush.msra.mxu0 0.0
    %549 = vmatpush.msra.mxu0 0.0
    %550 = vmatpush.msra.mxu0 0.0
    %551 = vmatpush.msra.mxu0 0.0
    %552 = vmatpush.msra.mxu0 0.0
    %553 = vmatpush.msra.mxu0 0.0
    %554 = vmatpush.msra.mxu0 0.0
    %555 = vmatpush.msra.mxu0 0.0
    %556 = vmatpush.msra.mxu0 0.0
    %557 = vmatpush.msra.mxu0 0.0
    %558 = vmatpush.msra.mxu0 0.0
    %559 = vmatpush.msra.mxu0 0.0
    %560 = vmatpush.msra.mxu0 0.0
    %561 = vmatpush.msra.mxu0 %v541
    %562 = vmatmul.f32.gmra.mxu0 %v544
    %v563 = vpop.f32.mrf.mxu0
    %v564 = vadd.f32 0.0, %v563
    %565 = vdwg.mxu0
    %566 = vrot.lane.b32.xlu0 %v237, 112
    %v567 = vpop.permute.xlu0 %566
    %v570 = vsel %vm267, %v539, 0
    %572 = vmatpush.msra.mxu0 0.0
    %573 = vmatpush.msra.mxu0 0.0
    %574 = vmatpush.msra.mxu0 0.0
    %575 = vmatpush.msra.mxu0 0.0
    %576 = vmatpush.msra.mxu0 0.0
    %577 = vmatpush.msra.mxu0 0.0
    %578 = vmatpush.msra.mxu0 0.0
    %579 = vmatpush.msra.mxu0 0.0
    %580 = vmatpush.msra.mxu0 0.0
    %581 = vmatpush.msra.mxu0 0.0
    %582 = vmatpush.msra.mxu0 0.0
    %583 = vmatpush.msra.mxu0 0.0
    %584 = vmatpush.msra.mxu0 0.0
    %585 = vmatpush.msra.mxu0 0.0
    %586 = vmatpush.msra.mxu0 0.0
    %587 = vmatpush.msra.mxu0 %v567
    %588 = vmatmul.f32.gmra.mxu0 %v570
    %v589 = vpop.f32.mrf.mxu0
    %v590 = vadd.f32 0.0, %v589
    %591 = vdwg.mxu0
    %v593 = vsel %vm267, %v564, 0
    %v596 = vsel %vm267, %v590, 0
    %598 = vmatpush.msra.mxu0 0.0
    %599 = vmatpush.msra.mxu0 0.0
    %600 = vmatpush.msra.mxu0 0.0
    %601 = vmatpush.msra.mxu0 0.0
    %602 = vmatpush.msra.mxu0 0.0
    %603 = vmatpush.msra.mxu0 0.0
    %604 = vmatpush.msra.mxu0 0.0
    %605 = vmatpush.msra.mxu0 0.0
    %606 = vmatpush.msra.mxu0 0.0
    %607 = vmatpush.msra.mxu0 0.0
    %608 = vmatpush.msra.mxu0 0.0
    %609 = vmatpush.msra.mxu0 0.0
    %610 = vmatpush.msra.mxu0 0.0
    %611 = vmatpush.msra.mxu0 0.0
    %612 = vmatpush.msra.mxu0 0.0
    %613 = vmatpush.msra.mxu0 %v82
    %614 = vmatmul.f32.gmra.mxu0 %v593
    %v615 = vpop.f32.mrf.mxu0
    %v616 = vadd.f32 0.0, %v615
    %617 = vmatmul.f32.gmra.mxu0 %v596
    %v618 = vpop.f32.mrf.mxu0
    %v619 = vadd.f32 0.0, %v618
    %620 = vdwg.mxu0
    %v621 = vadd.f32 %v489, %v616
    %v622 = vadd.f32 %v492, %v619
    %623 = vset.pattern.permute.xlu0 3
    %624 = vperm.xlu0 %623, %v139
    %v625 = vpop.permute.xlu0 %624
    %627 = vset.pattern.permute.xlu0 3
    %628 = vperm.xlu0 %627, %v140
    %v629 = vpop.permute.xlu0 %628
    %v631 = vsub.f32 %v108, %v625
    %v632 = vsub.f32 %v108, %v629
    %v633 = vmul.f32 %v631, %v631
    %v634 = vmul.f32 %v632, %v632
    %v635 = vsub.f32 0.0, %v633
    %v636 = vsub.f32 0.0, %v634
    %637 = vset.pattern.permute.xlu0 3
    %638 = vperm.xlu0 %637, %v200
    %v639 = vpop.permute.xlu0 %638
    %641 = vset.pattern.permute.xlu0 3
    %642 = vperm.xlu0 %641, %v215
    %v643 = vpop.permute.xlu0 %642
    %v645 = vmul.f32 %v635, %v639
    %v646 = vmul.f32 %v636, %v643
    %v647 = vsel %vm267, %v645, -inf
    %648 = vmax.xlane.f32.xlu0 %v647
    %v649 = vpop.xlane.xlu0 %648
    %v650 = vsel %vm267, %v646, -inf
    %651 = vmax.xlane.f32.xlu0 %v650
    %v652 = vpop.xlane.xlu0 %651
    %v653 = vsub.f32 %v645, %v649
    %v654 = vsub.f32 %v646, %v652
    %v655 = vmul.f32 %v653, 1.442695
    %v656 = vpow.pop %v655
    %v657 = vmul.f32 %v654, 1.442695
    %v658 = vpow.pop %v657
    %v659 = vsel %vm267, %v656, 0.0
    %660 = vadd.xlane.f32.xlu0 %v659
    %v661 = vpop.xlane.xlu0 %660
    %v662 = vsel %vm267, %v658, 0.0
    %663 = vadd.xlane.f32.xlu0 %v662
    %v664 = vpop.xlane.xlu0 %663
    %v665 = vrcp.pop %v661
    %v666 = vrcp.pop %v664
    %v667 = vmul.f32 %v656, %v665
    %v668 = vmul.f32 %v658, %v666
    %669 = vrot.lane.b32.xlu0 %v234, 104
    %v670 = vpop.permute.xlu0 %669
    %v673 = vsel %vm267, %v667, 0
    %675 = vmatpush.msra.mxu0 0.0
    %676 = vmatpush.msra.mxu0 0.0
    %677 = vmatpush.msra.mxu0 0.0
    %678 = vmatpush.msra.mxu0 0.0
    %679 = vmatpush.msra.mxu0 0.0
    %680 = vmatpush.msra.mxu0 0.0
    %681 = vmatpush.msra.mxu0 0.0
    %682 = vmatpush.msra.mxu0 0.0
    %683 = vmatpush.msra.mxu0 0.0
    %684 = vmatpush.msra.mxu0 0.0
    %685 = vmatpush.msra.mxu0 0.0
    %686 = vmatpush.msra.mxu0 0.0
    %687 = vmatpush.msra.mxu0 0.0
    %688 = vmatpush.msra.mxu0 0.0
    %689 = vmatpush.msra.mxu0 0.0
    %690 = vmatpush.msra.mxu0 %v670
    %691 = vmatmul.f32.gmra.mxu0 %v673
    %v692 = vpop.f32.mrf.mxu0
    %v693 = vadd.f32 0.0, %v692
    %694 = vdwg.mxu0
    %695 = vrot.lane.b32.xlu0 %v237, 104
    %v696 = vpop.permute.xlu0 %695
    %v699 = vsel %vm267, %v668, 0
    %701 = vmatpush.msra.mxu0 0.0
    %702 = vmatpush.msra.mxu0 0.0
    %703 = vmatpush.msra.mxu0 0.0
    %704 = vmatpush.msra.mxu0 0.0
    %705 = vmatpush.msra.mxu0 0.0
    %706 = vmatpush.msra.mxu0 0.0
    %707 = vmatpush.msra.mxu0 0.0
    %708 = vmatpush.msra.mxu0 0.0
    %709 = vmatpush.msra.mxu0 0.0
    %710 = vmatpush.msra.mxu0 0.0
    %711 = vmatpush.msra.mxu0 0.0
    %712 = vmatpush.msra.mxu0 0.0
    %713 = vmatpush.msra.mxu0 0.0
    %714 = vmatpush.msra.mxu0 0.0
    %715 = vmatpush.msra.mxu0 0.0
    %716 = vmatpush.msra.mxu0 %v696
    %717 = vmatmul.f32.gmra.mxu0 %v699
    %v718 = vpop.f32.mrf.mxu0
    %v719 = vadd.f32 0.0, %v718
    %720 = vdwg.mxu0
    %v722 = vsel %vm267, %v693, 0
    %v725 = vsel %vm267, %v719, 0
    %727 = vmatpush.msra.mxu0 0.0
    %728 = vmatpush.msra.mxu0 0.0
    %729 = vmatpush.msra.mxu0 0.0
    %730 = vmatpush.msra.mxu0 0.0
    %731 = vmatpush.msra.mxu0 0.0
    %732 = vmatpush.msra.mxu0 0.0
    %733 = vmatpush.msra.mxu0 0.0
    %734 = vmatpush.msra.mxu0 0.0
    %735 = vmatpush.msra.mxu0 0.0
    %736 = vmatpush.msra.mxu0 0.0
    %737 = vmatpush.msra.mxu0 0.0
    %738 = vmatpush.msra.mxu0 0.0
    %739 = vmatpush.msra.mxu0 0.0
    %740 = vmatpush.msra.mxu0 0.0
    %741 = vmatpush.msra.mxu0 0.0
    %742 = vmatpush.msra.mxu0 %v83
    %743 = vmatmul.f32.gmra.mxu0 %v722
    %v744 = vpop.f32.mrf.mxu0
    %v745 = vadd.f32 0.0, %v744
    %746 = vmatmul.f32.gmra.mxu0 %v725
    %v747 = vpop.f32.mrf.mxu0
    %v748 = vadd.f32 0.0, %v747
    %749 = vdwg.mxu0
    %v750 = vadd.f32 %v621, %v745
    %v751 = vadd.f32 %v622, %v748
    %v752 = vadd.f32 %v66, %v750
    %v753 = vadd.f32 %v67, %v751
    %v754 = vsel %vm109, %v752, 0.0
    %755 = vadd.xlane.f32.xlu0 %v754
    %v756 = vpop.xlane.xlu0 %755
    %v757 = vsel %vm109, %v753, 0.0
    %758 = vadd.xlane.f32.xlu0 %v757
    %v759 = vpop.xlane.xlu0 %758
    %v760 = vrcp.pop 32.0
    %v761 = vmul.f32 32.0, %v760
    %v762 = vsub.f32 1.0, %v761
    %v763 = vmul.f32 %v760, %v762
    %v764 = vadd.f32 %v760, %v763
    %vm765 = vweird.f32 %v760
    %v766 = vsel %vm765, %v760, %v764
    %v767 = vmul.f32 %v756, %v766
    %v768 = vmul.f32 %v759, %v766
    %v769 = vsub.f32 %v752, %v767
    %v770 = vsub.f32 %v753, %v768
    %v771 = vmul.f32 %v769, %v769
    %v772 = vmul.f32 %v770, %v770
    %v773 = vsel %vm109, %v771, 0.0
    %774 = vadd.xlane.f32.xlu0 %v773
    %v775 = vpop.xlane.xlu0 %774
    %v776 = vsel %vm109, %v772, 0.0
    %777 = vadd.xlane.f32.xlu0 %v776
    %v778 = vpop.xlane.xlu0 %777
    %v779 = vmul.f32 %v775, %v766
    %v780 = vmul.f32 %v778, %v766
    %v781 = vadd.f32 %v779, 1e-05
    %v782 = vadd.f32 %v780, 1e-05
    %v783 = vrsqrt.pop %v781
    %v784 = vmul.f32 %v783, %v781
    %v785 = vmul.f32 %v784, %v783
    %v786 = vmul.f32 0.5, %v785
    %v787 = vsub.f32 1.5, %v786
    %v788 = vmul.f32 %v783, %v787
    %vm789 = vweird.f32 %v781
    %vm790 = vweird.f32 %v783
    %vm791 = vmor %vm789, %vm790
    %v792 = vsel %vm791, %v783, %v788
    %v793 = vrsqrt.pop %v782
    %v794 = vmul.f32 %v793, %v782
    %v795 = vmul.f32 %v794, %v793
    %v796 = vmul.f32 0.5, %v795
    %v797 = vsub.f32 1.5, %v796
    %v798 = vmul.f32 %v793, %v797
    %vm799 = vweird.f32 %v782
    %vm800 = vweird.f32 %v793
    %vm801 = vmor %vm799, %vm800
    %v802 = vsel %vm801, %v793, %v798
    %v803 = vmul.f32 %v769, %v792
    %v804 = vmul.f32 %v770, %v802
    %v806 = vperm.slane %v98, 0
    %v808 = vmul.f32 %v803, %v806
    %v809 = vmul.f32 %v804, %v806
    %v811 = vperm.slane %v99, 0
    %v813 = vadd.f32 %v808, %v811
    %v814 = vadd.f32 %v809, %v811
    %v816 = vperm.slane %v88, 0
    %v819 = vsel %vm109, %v813, 0
    %v822 = vsel %vm109, %v814, 0
    %824 = vmatpush.msra.mxu0 0.0
    %825 = vmatpush.msra.mxu0 0.0
    %826 = vmatpush.msra.mxu0 0.0
    %827 = vmatpush.msra.mxu0 0.0
    %828 = vmatpush.msra.mxu0 0.0
    %829 = vmatpush.msra.mxu0 0.0
    %830 = vmatpush.msra.mxu0 0.0
    %831 = vmatpush.msra.mxu0 0.0
    %832 = vmatpush.msra.mxu0 0.0
    %833 = vmatpush.msra.mxu0 0.0
    %834 = vmatpush.msra.mxu0 0.0
    %835 = vmatpush.msra.mxu0 0.0
    %836 = vmatpush.msra.mxu0 %v87
    %837 = vmatpush.msra.mxu0 %v86
    %838 = vmatpush.msra.mxu0 %v85
    %839 = vmatpush.msra.mxu0 %v84
    %840 = vmatmul.f32.gmra.mxu0 %v819
    %v841 = vpop.f32.mrf.mxu0
    %v842 = vadd.f32 %v816, %v841
    %843 = vmatmul.f32.gmra.mxu0 %v822
    %v844 = vpop.f32.mrf.mxu0
    %v845 = vadd.f32 %v816, %v844
    %846 = vdwg.mxu0
    %v847 = vmax.f32 %v842, 0.0
    %v848 = vmax.f32 %v845, 0.0
    %v850 = vperm.slane %v97, 0
    %vm852 = vcmask 523264
    %v854 = vsel %vm852, %v847, 0
    %v857 = vsel %vm852, %v848, 0
    %859 = vmatpush.msra.mxu0 0.0
    %860 = vmatpush.msra.mxu0 0.0
    %861 = vmatpush.msra.mxu0 0.0
    %862 = vmatpush.msra.mxu0 0.0
    %863 = vmatpush.msra.mxu0 0.0
    %864 = vmatpush.msra.mxu0 0.0
    %865 = vmatpush.msra.mxu0 0.0
    %866 = vmatpush.msra.mxu0 0.0
    %867 = vmatpush.msra.mxu0 %v96
    %868 = vmatpush.msra.mxu0 %v95
    %869 = vmatpush.msra.mxu0 %v94
    %870 = vmatpush.msra.mxu0 %v93
    %871 = vmatpush.msra.mxu0 %v92
    %872 = vmatpush.msra.mxu0 %v91
    %873 = vmatpush.msra.mxu0 %v90
    %874 = vmatpush.msra.mxu0 %v89
    %875 = vmatmul.f32.gmra.mxu0 %v854
    %v876 = vpop.f32.mrf.mxu0
    %v877 = vadd.f32 %v850, %v876
    %878 = vmatmul.f32.gmra.mxu0 %v857
    %v879 = vpop.f32.mrf.mxu0
    %v880 = vadd.f32 %v850, %v879
    %881 = vdwg.mxu0
    %v882 = vadd.f32 %v813, %v877
    %v883 = vadd.f32 %v814, %v880
    %v884 = vsel %vm109, %v882, 0.0
    %885 = vadd.xlane.f32.xlu0 %v884
    %v886 = vpop.xlane.xlu0 %885
    %v887 = vsel %vm109, %v883, 0.0
    %888 = vadd.xlane.f32.xlu0 %v887
    %v889 = vpop.xlane.xlu0 %888
    %v890 = vmul.f32 %v886, %v766
    %v891 = vmul.f32 %v889, %v766
    %v892 = vsub.f32 %v882, %v890
    %v893 = vsub.f32 %v883, %v891
    %v894 = vmul.f32 %v892, %v892
    %v895 = vmul.f32 %v893, %v893
    %v896 = vsel %vm109, %v894, 0.0
    %897 = vadd.xlane.f32.xlu0 %v896
    %v898 = vpop.xlane.xlu0 %897
    %v899 = vsel %vm109, %v895, 0.0
    %900 = vadd.xlane.f32.xlu0 %v899
    %v901 = vpop.xlane.xlu0 %900
    %v902 = vmul.f32 %v898, %v766
    %v903 = vmul.f32 %v901, %v766
    %v904 = vadd.f32 %v902, 1e-05
    %v905 = vadd.f32 %v903, 1e-05
    %v906 = vrsqrt.pop %v904
    %v907 = vmul.f32 %v906, %v904
    %v908 = vmul.f32 %v907, %v906
    %v909 = vmul.f32 0.5, %v908
    %v910 = vsub.f32 1.5, %v909
    %v911 = vmul.f32 %v906, %v910
    %vm912 = vweird.f32 %v904
    %vm913 = vweird.f32 %v906
    %vm914 = vmor %vm912, %vm913
    %v915 = vsel %vm914, %v906, %v911
    %v916 = vrsqrt.pop %v905
    %v917 = vmul.f32 %v916, %v905
    %v918 = vmul.f32 %v917, %v916
    %v919 = vmul.f32 0.5, %v918
    %v920 = vsub.f32 1.5, %v919
    %v921 = vmul.f32 %v916, %v920
    %vm922 = vweird.f32 %v905
    %vm923 = vweird.f32 %v916
    %vm924 = vmor %vm922, %vm923
    %v925 = vsel %vm924, %v916, %v921
    %v926 = vmul.f32 %v892, %v915
    %v927 = vmul.f32 %v893, %v925
    %v929 = vperm.slane %v100, 0
    %v931 = vmul.f32 %v926, %v929
    %v932 = vmul.f32 %v927, %v929
    %v934 = vperm.slane %v101, 0
    %v936 = vadd.f32 %v931, %v934
    %v937 = vadd.f32 %v932, %v934
    %v939 = vsel %vm109, %v936, 0
    %v942 = vsel %vm109, %v937, 0
    %944 = vmatpush.msra.mxu0 0.0
    %945 = vmatpush.msra.mxu0 0.0
    %946 = vmatpush.msra.mxu0 0.0
    %947 = vmatpush.msra.mxu0 0.0
    %948 = vmatpush.msra.mxu0 0.0
    %949 = vmatpush.msra.mxu0 0.0
    %950 = vmatpush.msra.mxu0 0.0
    %951 = vmatpush.msra.mxu0 0.0
    %952 = vmatpush.msra.mxu0 0.0
    %953 = vmatpush.msra.mxu0 0.0
    %954 = vmatpush.msra.mxu0 0.0
    %955 = vmatpush.msra.mxu0 0.0
    %956 = vmatpush.msra.mxu0 %v71
    %957 = vmatpush.msra.mxu0 %v70
    %958 = vmatpush.msra.mxu0 %v69
    %959 = vmatpush.msra.mxu0 %v68
    %960 = vmatmul.f32.gmra.mxu0 %v939
    %v961 = vpop.f32.mrf.mxu0
    %v962 = vadd.f32 0.0, %v961
    %963 = vmatmul.f32.gmra.mxu0 %v942
    %v964 = vpop.f32.mrf.mxu0
    %v965 = vadd.f32 0.0, %v964
    %966 = vdwg.mxu0
    %v967 = vmul.f32 %v962, 8.0
    %v968 = vmul.f32 %v965, 8.0
    %969 = vmatpush.msra.mxu0 0.0
    %970 = vmatpush.msra.mxu0 0.0
    %971 = vmatpush.msra.mxu0 0.0
    %972 = vmatpush.msra.mxu0 0.0
    %973 = vmatpush.msra.mxu0 0.0
    %974 = vmatpush.msra.mxu0 0.0
    %975 = vmatpush.msra.mxu0 0.0
    %976 = vmatpush.msra.mxu0 0.0
    %977 = vmatpush.msra.mxu0 0.0
    %978 = vmatpush.msra.mxu0 0.0
    %979 = vmatpush.msra.mxu0 0.0
    %980 = vmatpush.msra.mxu0 0.0
    %981 = vmatpush.msra.mxu0 %v75
    %982 = vmatpush.msra.mxu0 %v74
    %983 = vmatpush.msra.mxu0 %v73
    %984 = vmatpush.msra.mxu0 %v72
    %985 = vmatmul.f32.gmra.mxu0 %v939
    %v986 = vpop.f32.mrf.mxu0
    %v987 = vadd.f32 0.0, %v986
    %988 = vmatmul.f32.gmra.mxu0 %v942
    %v989 = vpop.f32.mrf.mxu0
    %v990 = vadd.f32 0.0, %v989
    %991 = vdwg.mxu0
    %v992 = vmax.f32 %v987, 0.0
    %v993 = vmax.f32 %v990, 0.0
    %v994 = vand.u32 2147483647, %v987
    %v995 = vand.u32 2147483647, %v990
    %v996 = vsub.f32 0.0, %v994
    %v997 = vsub.f32 0.0, %v995
    %v998 = vmul.f32 %v996, 1.442695
    %v999 = vpow.pop %v998
    %v1000 = vmul.f32 %v997, 1.442695
    %v1001 = vpow.pop %v1000
    %v1002 = vadd.f32 %v999, 1.0
    %v1003 = vadd.f32 %v1001, 1.0
    %v1004 = vlog2.pop %v1002
    %v1005 = vmul.f32 %v1004, 0.6931472
    %v1006 = vlog2.pop %v1003
    %v1007 = vmul.f32 %v1006, 0.6931472
    %v1008 = vadd.f32 %v992, %v1005
    %v1009 = vadd.f32 %v993, %v1007
    %v1010 = vadd.f32 %v1008, 1.0
    %v1011 = vadd.f32 %v1009, 1.0
    %v1012 = vmul.f32 %v1010, %v1010
    %v1013 = vmul.f32 %v1011, %v1011
    %v1014 = vrcp.pop %v1012
    %v1015 = vmul.f32 %v1012, %v1014
    %v1016 = vsub.f32 1.0, %v1015
    %v1017 = vmul.f32 %v1014, %v1016
    %v1018 = vadd.f32 %v1014, %v1017
    %vm1019 = vweird.f32 %v1012
    %vm1020 = vweird.f32 %v1014
    %vm1021 = vmor %vm1019, %vm1020
    %v1022 = vsel %vm1021, %v1014, %v1018
    %v1023 = vand.u32 2147483647, %v1012
    %vm1024 = vcmp.eq.f32.partialorder %v1023, 8.507059e+37
    %v1025 = vand.u32 %v1012, 2147483648
    %v1026 = vor.u32 1.1754944e-38, %v1025
    %v1027 = vsel %vm1024, %v1026, %v1022
    %v1028 = vmul.f32 0.5, %v1027
    %v1029 = vrcp.pop %v1013
    %v1030 = vmul.f32 %v1013, %v1029
    %v1031 = vsub.f32 1.0, %v1030
    %v1032 = vmul.f32 %v1029, %v1031
    %v1033 = vadd.f32 %v1029, %v1032
    %vm1034 = vweird.f32 %v1013
    %vm1035 = vweird.f32 %v1029
    %vm1036 = vmor %vm1034, %vm1035
    %v1037 = vsel %vm1036, %v1029, %v1033
    %v1038 = vand.u32 2147483647, %v1013
    %vm1039 = vcmp.eq.f32.partialorder %v1038, 8.507059e+37
    %v1040 = vand.u32 %v1013, 2147483648
    %v1041 = vor.u32 1.1754944e-38, %v1040
    %v1042 = vsel %vm1039, %v1041, %v1037
    %v1043 = vmul.f32 0.5, %v1042
    %1044 = vmatpush.msra.mxu0 0.0
    %1045 = vmatpush.msra.mxu0 0.0
    %1046 = vmatpush.msra.mxu0 0.0
    %1047 = vmatpush.msra.mxu0 0.0
    %1048 = vmatpush.msra.mxu0 0.0
    %1049 = vmatpush.msra.mxu0 0.0
    %1050 = vmatpush.msra.mxu0 0.0
    %1051 = vmatpush.msra.mxu0 0.0
    %1052 = vmatpush.msra.mxu0 0.0
    %1053 = vmatpush.msra.mxu0 0.0
    %1054 = vmatpush.msra.mxu0 0.0
    %1055 = vmatpush.msra.mxu0 0.0
    %1056 = vmatpush.msra.mxu0 %v79
    %1057 = vmatpush.msra.mxu0 %v78
    %1058 = vmatpush.msra.mxu0 %v77
    %1059 = vmatpush.msra.mxu0 %v76
    %1060 = vmatmul.f32.gmra.mxu0 %v939
    %v1061 = vpop.f32.mrf.mxu0
    %v1062 = vadd.f32 0.0, %v1061
    %1063 = vmatmul.f32.gmra.mxu0 %v942
    %v1064 = vpop.f32.mrf.mxu0
    %v1065 = vadd.f32 0.0, %v1064
    %1066 = vdwg.mxu0
    %1068 = vset.pattern.permute.xlu0 0
    %1069 = vperm.xlu0 %1068, %v967
    %v1070 = vpop.permute.xlu0 %1069
    %1073 = vset.pattern.permute.xlu0 0
    %1074 = vperm.xlu0 %1073, %v968
    %v1075 = vpop.permute.xlu0 %1074
    %v1077 = vsub.f32 %v108, %v1070
    %v1078 = vsub.f32 %v108, %v1075
    %v1079 = vmul.f32 %v1077, %v1077
    %v1080 = vmul.f32 %v1078, %v1078
    %v1081 = vsub.f32 0.0, %v1079
    %v1082 = vsub.f32 0.0, %v1080
    %1084 = vset.pattern.permute.xlu0 0
    %1085 = vperm.xlu0 %1084, %v1028
    %v1086 = vpop.permute.xlu0 %1085
    %1089 = vset.pattern.permute.xlu0 0
    %1090 = vperm.xlu0 %1089, %v1043
    %v1091 = vpop.permute.xlu0 %1090
    %v1093 = vmul.f32 %v1081, %v1086
    %v1094 = vmul.f32 %v1082, %v1091
    %v1095 = vsel %vm267, %v1093, -inf
    %1096 = vmax.xlane.f32.xlu0 %v1095
    %v1097 = vpop.xlane.xlu0 %1096
    %v1098 = vsel %vm267, %v1094, -inf
    %1099 = vmax.xlane.f32.xlu0 %v1098
    %v1100 = vpop.xlane.xlu0 %1099
    %v1101 = vsub.f32 %v1093, %v1097
    %v1102 = vsub.f32 %v1094, %v1100
    %v1103 = vmul.f32 %v1101, 1.442695
    %v1104 = vpow.pop %v1103
    %v1105 = vmul.f32 %v1102, 1.442695
    %v1106 = vpow.pop %v1105
    %v1107 = vsel %vm267, %v1104, 0.0
    %1108 = vadd.xlane.f32.xlu0 %v1107
    %v1109 = vpop.xlane.xlu0 %1108
    %v1110 = vsel %vm267, %v1106, 0.0
    %1111 = vadd.xlane.f32.xlu0 %v1110
    %v1112 = vpop.xlane.xlu0 %1111
    %v1113 = vrcp.pop %v1109
    %v1114 = vrcp.pop %v1112
    %v1115 = vmul.f32 %v1104, %v1113
    %v1116 = vmul.f32 %v1106, %v1114
    %v1118 = vsel %vm267, %v1115, 0
    %1120 = vmatpush.msra.mxu0 0.0
    %1121 = vmatpush.msra.mxu0 0.0
    %1122 = vmatpush.msra.mxu0 0.0
    %1123 = vmatpush.msra.mxu0 0.0
    %1124 = vmatpush.msra.mxu0 0.0
    %1125 = vmatpush.msra.mxu0 0.0
    %1126 = vmatpush.msra.mxu0 0.0
    %1127 = vmatpush.msra.mxu0 0.0
    %1128 = vmatpush.msra.mxu0 0.0
    %1129 = vmatpush.msra.mxu0 0.0
    %1130 = vmatpush.msra.mxu0 0.0
    %1131 = vmatpush.msra.mxu0 0.0
    %1132 = vmatpush.msra.mxu0 0.0
    %1133 = vmatpush.msra.mxu0 0.0
    %1134 = vmatpush.msra.mxu0 0.0
    %1135 = vmatpush.msra.mxu0 %v1062
    %1136 = vmatmul.f32.gmra.mxu0 %v1118
    %v1137 = vpop.f32.mrf.mxu0
    %v1138 = vadd.f32 0.0, %v1137
    %1139 = vdwg.mxu0
    %v1141 = vsel %vm267, %v1116, 0
    %1143 = vmatpush.msra.mxu0 0.0
    %1144 = vmatpush.msra.mxu0 0.0
    %1145 = vmatpush.msra.mxu0 0.0
    %1146 = vmatpush.msra.mxu0 0.0
    %1147 = vmatpush.msra.mxu0 0.0
    %1148 = vmatpush.msra.mxu0 0.0
    %1149 = vmatpush.msra.mxu0 0.0
    %1150 = vmatpush.msra.mxu0 0.0
    %1151 = vmatpush.msra.mxu0 0.0
    %1152 = vmatpush.msra.mxu0 0.0
    %1153 = vmatpush.msra.mxu0 0.0
    %1154 = vmatpush.msra.mxu0 0.0
    %1155 = vmatpush.msra.mxu0 0.0
    %1156 = vmatpush.msra.mxu0 0.0
    %1157 = vmatpush.msra.mxu0 0.0
    %1158 = vmatpush.msra.mxu0 %v1065
    %1159 = vmatmul.f32.gmra.mxu0 %v1141
    %v1160 = vpop.f32.mrf.mxu0
    %v1161 = vadd.f32 0.0, %v1160
    %1162 = vdwg.mxu0
    %1163 = vset.pattern.permute.xlu0 1
    %1164 = vperm.xlu0 %1163, %v967
    %v1165 = vpop.permute.xlu0 %1164
    %1167 = vset.pattern.permute.xlu0 1
    %1168 = vperm.xlu0 %1167, %v968
    %v1169 = vpop.permute.xlu0 %1168
    %v1171 = vsub.f32 %v108, %v1165
    %v1172 = vsub.f32 %v108, %v1169
    %v1173 = vmul.f32 %v1171, %v1171
    %v1174 = vmul.f32 %v1172, %v1172
    %v1175 = vsub.f32 0.0, %v1173
    %v1176 = vsub.f32 0.0, %v1174
    %1177 = vset.pattern.permute.xlu0 1
    %1178 = vperm.xlu0 %1177, %v1028
    %v1179 = vpop.permute.xlu0 %1178
    %1181 = vset.pattern.permute.xlu0 1
    %1182 = vperm.xlu0 %1181, %v1043
    %v1183 = vpop.permute.xlu0 %1182
    %v1185 = vmul.f32 %v1175, %v1179
    %v1186 = vmul.f32 %v1176, %v1183
    %v1187 = vsel %vm267, %v1185, -inf
    %1188 = vmax.xlane.f32.xlu0 %v1187
    %v1189 = vpop.xlane.xlu0 %1188
    %v1190 = vsel %vm267, %v1186, -inf
    %1191 = vmax.xlane.f32.xlu0 %v1190
    %v1192 = vpop.xlane.xlu0 %1191
    %v1193 = vsub.f32 %v1185, %v1189
    %v1194 = vsub.f32 %v1186, %v1192
    %v1195 = vmul.f32 %v1193, 1.442695
    %v1196 = vpow.pop %v1195
    %v1197 = vmul.f32 %v1194, 1.442695
    %v1198 = vpow.pop %v1197
    %v1199 = vsel %vm267, %v1196, 0.0
    %1200 = vadd.xlane.f32.xlu0 %v1199
    %v1201 = vpop.xlane.xlu0 %1200
    %v1202 = vsel %vm267, %v1198, 0.0
    %1203 = vadd.xlane.f32.xlu0 %v1202
    %v1204 = vpop.xlane.xlu0 %1203
    %v1205 = vrcp.pop %v1201
    %v1206 = vrcp.pop %v1204
    %v1207 = vmul.f32 %v1196, %v1205
    %v1208 = vmul.f32 %v1198, %v1206
    %1210 = vrot.lane.b32.xlu0 %v1062, 120
    %v1211 = vpop.permute.xlu0 %1210
    %v1214 = vsel %vm267, %v1207, 0
    %1216 = vmatpush.msra.mxu0 0.0
    %1217 = vmatpush.msra.mxu0 0.0
    %1218 = vmatpush.msra.mxu0 0.0
    %1219 = vmatpush.msra.mxu0 0.0
    %1220 = vmatpush.msra.mxu0 0.0
    %1221 = vmatpush.msra.mxu0 0.0
    %1222 = vmatpush.msra.mxu0 0.0
    %1223 = vmatpush.msra.mxu0 0.0
    %1224 = vmatpush.msra.mxu0 0.0
    %1225 = vmatpush.msra.mxu0 0.0
    %1226 = vmatpush.msra.mxu0 0.0
    %1227 = vmatpush.msra.mxu0 0.0
    %1228 = vmatpush.msra.mxu0 0.0
    %1229 = vmatpush.msra.mxu0 0.0
    %1230 = vmatpush.msra.mxu0 0.0
    %1231 = vmatpush.msra.mxu0 %v1211
    %1232 = vmatmul.f32.gmra.mxu0 %v1214
    %v1233 = vpop.f32.mrf.mxu0
    %v1234 = vadd.f32 0.0, %v1233
    %1235 = vdwg.mxu0
    %1237 = vrot.lane.b32.xlu0 %v1065, 120
    %v1238 = vpop.permute.xlu0 %1237
    %v1241 = vsel %vm267, %v1208, 0
    %1243 = vmatpush.msra.mxu0 0.0
    %1244 = vmatpush.msra.mxu0 0.0
    %1245 = vmatpush.msra.mxu0 0.0
    %1246 = vmatpush.msra.mxu0 0.0
    %1247 = vmatpush.msra.mxu0 0.0
    %1248 = vmatpush.msra.mxu0 0.0
    %1249 = vmatpush.msra.mxu0 0.0
    %1250 = vmatpush.msra.mxu0 0.0
    %1251 = vmatpush.msra.mxu0 0.0
    %1252 = vmatpush.msra.mxu0 0.0
    %1253 = vmatpush.msra.mxu0 0.0
    %1254 = vmatpush.msra.mxu0 0.0
    %1255 = vmatpush.msra.mxu0 0.0
    %1256 = vmatpush.msra.mxu0 0.0
    %1257 = vmatpush.msra.mxu0 0.0
    %1258 = vmatpush.msra.mxu0 %v1238
    %1259 = vmatmul.f32.gmra.mxu0 %v1241
    %v1260 = vpop.f32.mrf.mxu0
    %v1261 = vadd.f32 0.0, %v1260
    %1262 = vdwg.mxu0
    %v1264 = vsel %vm267, %v1234, 0
    %v1267 = vsel %vm267, %v1261, 0
    %1269 = vmatpush.msra.mxu0 0.0
    %1270 = vmatpush.msra.mxu0 0.0
    %1271 = vmatpush.msra.mxu0 0.0
    %1272 = vmatpush.msra.mxu0 0.0
    %1273 = vmatpush.msra.mxu0 0.0
    %1274 = vmatpush.msra.mxu0 0.0
    %1275 = vmatpush.msra.mxu0 0.0
    %1276 = vmatpush.msra.mxu0 0.0
    %1277 = vmatpush.msra.mxu0 0.0
    %1278 = vmatpush.msra.mxu0 0.0
    %1279 = vmatpush.msra.mxu0 0.0
    %1280 = vmatpush.msra.mxu0 0.0
    %1281 = vmatpush.msra.mxu0 0.0
    %1282 = vmatpush.msra.mxu0 0.0
    %1283 = vmatpush.msra.mxu0 0.0
    %1284 = vmatpush.msra.mxu0 %v81
    %1285 = vmatmul.f32.gmra.mxu0 %v1264
    %v1286 = vpop.f32.mrf.mxu0
    %v1287 = vadd.f32 0.0, %v1286
    %1288 = vmatmul.f32.gmra.mxu0 %v1267
    %v1289 = vpop.f32.mrf.mxu0
    %v1290 = vadd.f32 0.0, %v1289
    %1291 = vdwg.mxu0
    %v1293 = vsel %vm267, %v1138, 0
    %v1296 = vsel %vm267, %v1161, 0
    %1298 = vmatpush.msra.mxu0 0.0
    %1299 = vmatpush.msra.mxu0 0.0
    %1300 = vmatpush.msra.mxu0 0.0
    %1301 = vmatpush.msra.mxu0 0.0
    %1302 = vmatpush.msra.mxu0 0.0
    %1303 = vmatpush.msra.mxu0 0.0
    %1304 = vmatpush.msra.mxu0 0.0
    %1305 = vmatpush.msra.mxu0 0.0
    %1306 = vmatpush.msra.mxu0 0.0
    %1307 = vmatpush.msra.mxu0 0.0
    %1308 = vmatpush.msra.mxu0 0.0
    %1309 = vmatpush.msra.mxu0 0.0
    %1310 = vmatpush.msra.mxu0 0.0
    %1311 = vmatpush.msra.mxu0 0.0
    %1312 = vmatpush.msra.mxu0 0.0
    %1313 = vmatpush.msra.mxu0 %v80
    %1314 = vmatmul.f32.gmra.mxu0 %v1293
    %v1315 = vpop.f32.mrf.mxu0
    %v1316 = vadd.f32 %v1287, %v1315
    %1317 = vmatmul.f32.gmra.mxu0 %v1296
    %v1318 = vpop.f32.mrf.mxu0
    %v1319 = vadd.f32 %v1290, %v1318
    %1320 = vdwg.mxu0
    %1321 = vset.pattern.permute.xlu0 2
    %1322 = vperm.xlu0 %1321, %v967
    %v1323 = vpop.permute.xlu0 %1322
    %1325 = vset.pattern.permute.xlu0 2
    %1326 = vperm.xlu0 %1325, %v968
    %v1327 = vpop.permute.xlu0 %1326
    %v1329 = vsub.f32 %v108, %v1323
    %v1330 = vsub.f32 %v108, %v1327
    %v1331 = vmul.f32 %v1329, %v1329
    %v1332 = vmul.f32 %v1330, %v1330
    %v1333 = vsub.f32 0.0, %v1331
    %v1334 = vsub.f32 0.0, %v1332
    %1335 = vset.pattern.permute.xlu0 2
    %1336 = vperm.xlu0 %1335, %v1028
    %v1337 = vpop.permute.xlu0 %1336
    %1339 = vset.pattern.permute.xlu0 2
    %1340 = vperm.xlu0 %1339, %v1043
    %v1341 = vpop.permute.xlu0 %1340
    %v1343 = vmul.f32 %v1333, %v1337
    %v1344 = vmul.f32 %v1334, %v1341
    %v1345 = vsel %vm267, %v1343, -inf
    %1346 = vmax.xlane.f32.xlu0 %v1345
    %v1347 = vpop.xlane.xlu0 %1346
    %v1348 = vsel %vm267, %v1344, -inf
    %1349 = vmax.xlane.f32.xlu0 %v1348
    %v1350 = vpop.xlane.xlu0 %1349
    %v1351 = vsub.f32 %v1343, %v1347
    %v1352 = vsub.f32 %v1344, %v1350
    %v1353 = vmul.f32 %v1351, 1.442695
    %v1354 = vpow.pop %v1353
    %v1355 = vmul.f32 %v1352, 1.442695
    %v1356 = vpow.pop %v1355
    %v1357 = vsel %vm267, %v1354, 0.0
    %1358 = vadd.xlane.f32.xlu0 %v1357
    %v1359 = vpop.xlane.xlu0 %1358
    %v1360 = vsel %vm267, %v1356, 0.0
    %1361 = vadd.xlane.f32.xlu0 %v1360
    %v1362 = vpop.xlane.xlu0 %1361
    %v1363 = vrcp.pop %v1359
    %v1364 = vrcp.pop %v1362
    %v1365 = vmul.f32 %v1354, %v1363
    %v1366 = vmul.f32 %v1356, %v1364
    %1367 = vrot.lane.b32.xlu0 %v1062, 112
    %v1368 = vpop.permute.xlu0 %1367
    %v1371 = vsel %vm267, %v1365, 0
    %1373 = vmatpush.msra.mxu0 0.0
    %1374 = vmatpush.msra.mxu0 0.0
    %1375 = vmatpush.msra.mxu0 0.0
    %1376 = vmatpush.msra.mxu0 0.0
    %1377 = vmatpush.msra.mxu0 0.0
    %1378 = vmatpush.msra.mxu0 0.0
    %1379 = vmatpush.msra.mxu0 0.0
    %1380 = vmatpush.msra.mxu0 0.0
    %1381 = vmatpush.msra.mxu0 0.0
    %1382 = vmatpush.msra.mxu0 0.0
    %1383 = vmatpush.msra.mxu0 0.0
    %1384 = vmatpush.msra.mxu0 0.0
    %1385 = vmatpush.msra.mxu0 0.0
    %1386 = vmatpush.msra.mxu0 0.0
    %1387 = vmatpush.msra.mxu0 0.0
    %1388 = vmatpush.msra.mxu0 %v1368
    %1389 = vmatmul.f32.gmra.mxu0 %v1371
    %v1390 = vpop.f32.mrf.mxu0
    %v1391 = vadd.f32 0.0, %v1390
    %1392 = vdwg.mxu0
    %1393 = vrot.lane.b32.xlu0 %v1065, 112
    %v1394 = vpop.permute.xlu0 %1393
    %v1397 = vsel %vm267, %v1366, 0
    %1399 = vmatpush.msra.mxu0 0.0
    %1400 = vmatpush.msra.mxu0 0.0
    %1401 = vmatpush.msra.mxu0 0.0
    %1402 = vmatpush.msra.mxu0 0.0
    %1403 = vmatpush.msra.mxu0 0.0
    %1404 = vmatpush.msra.mxu0 0.0
    %1405 = vmatpush.msra.mxu0 0.0
    %1406 = vmatpush.msra.mxu0 0.0
    %1407 = vmatpush.msra.mxu0 0.0
    %1408 = vmatpush.msra.mxu0 0.0
    %1409 = vmatpush.msra.mxu0 0.0
    %1410 = vmatpush.msra.mxu0 0.0
    %1411 = vmatpush.msra.mxu0 0.0
    %1412 = vmatpush.msra.mxu0 0.0
    %1413 = vmatpush.msra.mxu0 0.0
    %1414 = vmatpush.msra.mxu0 %v1394
    %1415 = vmatmul.f32.gmra.mxu0 %v1397
    %v1416 = vpop.f32.mrf.mxu0
    %v1417 = vadd.f32 0.0, %v1416
    %1418 = vdwg.mxu0
    %v1420 = vsel %vm267, %v1391, 0
    %v1423 = vsel %vm267, %v1417, 0
    %1425 = vmatpush.msra.mxu0 0.0
    %1426 = vmatpush.msra.mxu0 0.0
    %1427 = vmatpush.msra.mxu0 0.0
    %1428 = vmatpush.msra.mxu0 0.0
    %1429 = vmatpush.msra.mxu0 0.0
    %1430 = vmatpush.msra.mxu0 0.0
    %1431 = vmatpush.msra.mxu0 0.0
    %1432 = vmatpush.msra.mxu0 0.0
    %1433 = vmatpush.msra.mxu0 0.0
    %1434 = vmatpush.msra.mxu0 0.0
    %1435 = vmatpush.msra.mxu0 0.0
    %1436 = vmatpush.msra.mxu0 0.0
    %1437 = vmatpush.msra.mxu0 0.0
    %1438 = vmatpush.msra.mxu0 0.0
    %1439 = vmatpush.msra.mxu0 0.0
    %1440 = vmatpush.msra.mxu0 %v82
    %1441 = vmatmul.f32.gmra.mxu0 %v1420
    %v1442 = vpop.f32.mrf.mxu0
    %v1443 = vadd.f32 0.0, %v1442
    %1444 = vmatmul.f32.gmra.mxu0 %v1423
    %v1445 = vpop.f32.mrf.mxu0
    %v1446 = vadd.f32 0.0, %v1445
    %1447 = vdwg.mxu0
    %v1448 = vadd.f32 %v1316, %v1443
    %v1449 = vadd.f32 %v1319, %v1446
    %1450 = vset.pattern.permute.xlu0 3
    %1451 = vperm.xlu0 %1450, %v967
    %v1452 = vpop.permute.xlu0 %1451
    %1454 = vset.pattern.permute.xlu0 3
    %1455 = vperm.xlu0 %1454, %v968
    %v1456 = vpop.permute.xlu0 %1455
    %v1458 = vsub.f32 %v108, %v1452
    %v1459 = vsub.f32 %v108, %v1456
    %v1460 = vmul.f32 %v1458, %v1458
    %v1461 = vmul.f32 %v1459, %v1459
    %v1462 = vsub.f32 0.0, %v1460
    %v1463 = vsub.f32 0.0, %v1461
    %1464 = vset.pattern.permute.xlu0 3
    %1465 = vperm.xlu0 %1464, %v1028
    %v1466 = vpop.permute.xlu0 %1465
    %1468 = vset.pattern.permute.xlu0 3
    %1469 = vperm.xlu0 %1468, %v1043
    %v1470 = vpop.permute.xlu0 %1469
    %v1472 = vmul.f32 %v1462, %v1466
    %v1473 = vmul.f32 %v1463, %v1470
    %v1474 = vsel %vm267, %v1472, -inf
    %1475 = vmax.xlane.f32.xlu0 %v1474
    %v1476 = vpop.xlane.xlu0 %1475
    %v1477 = vsel %vm267, %v1473, -inf
    %1478 = vmax.xlane.f32.xlu0 %v1477
    %v1479 = vpop.xlane.xlu0 %1478
    %v1480 = vsub.f32 %v1472, %v1476
    %v1481 = vsub.f32 %v1473, %v1479
    %v1482 = vmul.f32 %v1480, 1.442695
    %v1483 = vpow.pop %v1482
    %v1484 = vmul.f32 %v1481, 1.442695
    %v1485 = vpow.pop %v1484
    %v1486 = vsel %vm267, %v1483, 0.0
    %1487 = vadd.xlane.f32.xlu0 %v1486
    %v1488 = vpop.xlane.xlu0 %1487
    %v1489 = vsel %vm267, %v1485, 0.0
    %1490 = vadd.xlane.f32.xlu0 %v1489
    %v1491 = vpop.xlane.xlu0 %1490
    %v1492 = vrcp.pop %v1488
    %v1493 = vrcp.pop %v1491
    %v1494 = vmul.f32 %v1483, %v1492
    %v1495 = vmul.f32 %v1485, %v1493
    %1496 = vrot.lane.b32.xlu0 %v1062, 104
    %v1497 = vpop.permute.xlu0 %1496
    %v1500 = vsel %vm267, %v1494, 0
    %1502 = vmatpush.msra.mxu0 0.0
    %1503 = vmatpush.msra.mxu0 0.0
    %1504 = vmatpush.msra.mxu0 0.0
    %1505 = vmatpush.msra.mxu0 0.0
    %1506 = vmatpush.msra.mxu0 0.0
    %1507 = vmatpush.msra.mxu0 0.0
    %1508 = vmatpush.msra.mxu0 0.0
    %1509 = vmatpush.msra.mxu0 0.0
    %1510 = vmatpush.msra.mxu0 0.0
    %1511 = vmatpush.msra.mxu0 0.0
    %1512 = vmatpush.msra.mxu0 0.0
    %1513 = vmatpush.msra.mxu0 0.0
    %1514 = vmatpush.msra.mxu0 0.0
    %1515 = vmatpush.msra.mxu0 0.0
    %1516 = vmatpush.msra.mxu0 0.0
    %1517 = vmatpush.msra.mxu0 %v1497
    %1518 = vmatmul.f32.gmra.mxu0 %v1500
    %v1519 = vpop.f32.mrf.mxu0
    %v1520 = vadd.f32 0.0, %v1519
    %1521 = vdwg.mxu0
    %1522 = vrot.lane.b32.xlu0 %v1065, 104
    %v1523 = vpop.permute.xlu0 %1522
    %v1526 = vsel %vm267, %v1495, 0
    %1528 = vmatpush.msra.mxu0 0.0
    %1529 = vmatpush.msra.mxu0 0.0
    %1530 = vmatpush.msra.mxu0 0.0
    %1531 = vmatpush.msra.mxu0 0.0
    %1532 = vmatpush.msra.mxu0 0.0
    %1533 = vmatpush.msra.mxu0 0.0
    %1534 = vmatpush.msra.mxu0 0.0
    %1535 = vmatpush.msra.mxu0 0.0
    %1536 = vmatpush.msra.mxu0 0.0
    %1537 = vmatpush.msra.mxu0 0.0
    %1538 = vmatpush.msra.mxu0 0.0
    %1539 = vmatpush.msra.mxu0 0.0
    %1540 = vmatpush.msra.mxu0 0.0
    %1541 = vmatpush.msra.mxu0 0.0
    %1542 = vmatpush.msra.mxu0 0.0
    %1543 = vmatpush.msra.mxu0 %v1523
    %1544 = vmatmul.f32.gmra.mxu0 %v1526
    %v1545 = vpop.f32.mrf.mxu0
    %v1546 = vadd.f32 0.0, %v1545
    %1547 = vdwg.mxu0
    %v1549 = vsel %vm267, %v1520, 0
    %v1552 = vsel %vm267, %v1546, 0
    %1554 = vmatpush.msra.mxu0 0.0
    %1555 = vmatpush.msra.mxu0 0.0
    %1556 = vmatpush.msra.mxu0 0.0
    %1557 = vmatpush.msra.mxu0 0.0
    %1558 = vmatpush.msra.mxu0 0.0
    %1559 = vmatpush.msra.mxu0 0.0
    %1560 = vmatpush.msra.mxu0 0.0
    %1561 = vmatpush.msra.mxu0 0.0
    %1562 = vmatpush.msra.mxu0 0.0
    %1563 = vmatpush.msra.mxu0 0.0
    %1564 = vmatpush.msra.mxu0 0.0
    %1565 = vmatpush.msra.mxu0 0.0
    %1566 = vmatpush.msra.mxu0 0.0
    %1567 = vmatpush.msra.mxu0 0.0
    %1568 = vmatpush.msra.mxu0 0.0
    %1569 = vmatpush.msra.mxu0 %v83
    %1570 = vmatmul.f32.gmra.mxu0 %v1549
    %v1571 = vpop.f32.mrf.mxu0
    %v1572 = vadd.f32 0.0, %v1571
    %1573 = vmatmul.f32.gmra.mxu0 %v1552
    %v1574 = vpop.f32.mrf.mxu0
    %v1575 = vadd.f32 0.0, %v1574
    %1576 = vdwg.mxu0
    %v1577 = vadd.f32 %v1448, %v1572
    %v1578 = vadd.f32 %v1449, %v1575
    %v1579 = vadd.f32 %v936, %v1577
    %v1580 = vadd.f32 %v937, %v1578
    %v1581 = vsel %vm109, %v1579, 0.0
    %1582 = vadd.xlane.f32.xlu0 %v1581
    %v1583 = vpop.xlane.xlu0 %1582
    %v1584 = vsel %vm109, %v1580, 0.0
    %1585 = vadd.xlane.f32.xlu0 %v1584
    %v1586 = vpop.xlane.xlu0 %1585
    %v1587 = vmul.f32 %v1583, %v766
    %v1588 = vmul.f32 %v1586, %v766
    %v1589 = vsub.f32 %v1579, %v1587
    %v1590 = vsub.f32 %v1580, %v1588
    %v1591 = vmul.f32 %v1589, %v1589
    %v1592 = vmul.f32 %v1590, %v1590
    %v1593 = vsel %vm109, %v1591, 0.0
    %1594 = vadd.xlane.f32.xlu0 %v1593
    %v1595 = vpop.xlane.xlu0 %1594
    %v1596 = vsel %vm109, %v1592, 0.0
    %1597 = vadd.xlane.f32.xlu0 %v1596
    %v1598 = vpop.xlane.xlu0 %1597
    %v1599 = vmul.f32 %v1595, %v766
    %v1600 = vmul.f32 %v1598, %v766
    %v1601 = vadd.f32 %v1599, 1e-05
    %v1602 = vadd.f32 %v1600, 1e-05
    %v1603 = vrsqrt.pop %v1601
    %v1604 = vmul.f32 %v1603, %v1601
    %v1605 = vmul.f32 %v1604, %v1603
    %v1606 = vmul.f32 0.5, %v1605
    %v1607 = vsub.f32 1.5, %v1606
    %v1608 = vmul.f32 %v1603, %v1607
    %vm1609 = vweird.f32 %v1601
    %vm1610 = vweird.f32 %v1603
    %vm1611 = vmor %vm1609, %vm1610
    %v1612 = vsel %vm1611, %v1603, %v1608
    %v1613 = vrsqrt.pop %v1602
    %v1614 = vmul.f32 %v1613, %v1602
    %v1615 = vmul.f32 %v1614, %v1613
    %v1616 = vmul.f32 0.5, %v1615
    %v1617 = vsub.f32 1.5, %v1616
    %v1618 = vmul.f32 %v1613, %v1617
    %vm1619 = vweird.f32 %v1602
    %vm1620 = vweird.f32 %v1613
    %vm1621 = vmor %vm1619, %vm1620
    %v1622 = vsel %vm1621, %v1613, %v1618
    %v1623 = vmul.f32 %v1589, %v1612
    %v1624 = vmul.f32 %v1590, %v1622
    %v1625 = vmul.f32 %v1623, %v806
    %v1626 = vmul.f32 %v1624, %v806
    %v1627 = vadd.f32 %v1625, %v811
    %v1628 = vadd.f32 %v1626, %v811
    %v1630 = vsel %vm109, %v1627, 0
    %v1633 = vsel %vm109, %v1628, 0
    %1635 = vmatpush.msra.mxu0 0.0
    %1636 = vmatpush.msra.mxu0 0.0
    %1637 = vmatpush.msra.mxu0 0.0
    %1638 = vmatpush.msra.mxu0 0.0
    %1639 = vmatpush.msra.mxu0 0.0
    %1640 = vmatpush.msra.mxu0 0.0
    %1641 = vmatpush.msra.mxu0 0.0
    %1642 = vmatpush.msra.mxu0 0.0
    %1643 = vmatpush.msra.mxu0 0.0
    %1644 = vmatpush.msra.mxu0 0.0
    %1645 = vmatpush.msra.mxu0 0.0
    %1646 = vmatpush.msra.mxu0 0.0
    %1647 = vmatpush.msra.mxu0 %v87
    %1648 = vmatpush.msra.mxu0 %v86
    %1649 = vmatpush.msra.mxu0 %v85
    %1650 = vmatpush.msra.mxu0 %v84
    %1651 = vmatmul.f32.gmra.mxu0 %v1630
    %v1652 = vpop.f32.mrf.mxu0
    %v1653 = vadd.f32 %v816, %v1652
    %1654 = vmatmul.f32.gmra.mxu0 %v1633
    %v1655 = vpop.f32.mrf.mxu0
    %v1656 = vadd.f32 %v816, %v1655
    %1657 = vdwg.mxu0
    %v1658 = vmax.f32 %v1653, 0.0
    %v1659 = vmax.f32 %v1656, 0.0
    %v1661 = vsel %vm852, %v1658, 0
    %v1664 = vsel %vm852, %v1659, 0
    %1666 = vmatpush.msra.mxu0 0.0
    %1667 = vmatpush.msra.mxu0 0.0
    %1668 = vmatpush.msra.mxu0 0.0
    %1669 = vmatpush.msra.mxu0 0.0
    %1670 = vmatpush.msra.mxu0 0.0
    %1671 = vmatpush.msra.mxu0 0.0
    %1672 = vmatpush.msra.mxu0 0.0
    %1673 = vmatpush.msra.mxu0 0.0
    %1674 = vmatpush.msra.mxu0 %v96
    %1675 = vmatpush.msra.mxu0 %v95
    %1676 = vmatpush.msra.mxu0 %v94
    %1677 = vmatpush.msra.mxu0 %v93
    %1678 = vmatpush.msra.mxu0 %v92
    %1679 = vmatpush.msra.mxu0 %v91
    %1680 = vmatpush.msra.mxu0 %v90
    %1681 = vmatpush.msra.mxu0 %v89
    %1682 = vmatmul.f32.gmra.mxu0 %v1661
    %v1683 = vpop.f32.mrf.mxu0
    %v1684 = vadd.f32 %v850, %v1683
    %1685 = vmatmul.f32.gmra.mxu0 %v1664
    %v1686 = vpop.f32.mrf.mxu0
    %v1687 = vadd.f32 %v850, %v1686
    %1688 = vdwg.mxu0
    %v1689 = vadd.f32 %v1627, %v1684
    %v1690 = vadd.f32 %v1628, %v1687
    %v1691 = vsel %vm109, %v1689, 0.0
    %1692 = vadd.xlane.f32.xlu0 %v1691
    %v1693 = vpop.xlane.xlu0 %1692
    %v1694 = vsel %vm109, %v1690, 0.0
    %1695 = vadd.xlane.f32.xlu0 %v1694
    %v1696 = vpop.xlane.xlu0 %1695
    %v1697 = vmul.f32 %v1693, %v766
    %v1698 = vmul.f32 %v1696, %v766
    %v1699 = vsub.f32 %v1689, %v1697
    %v1700 = vsub.f32 %v1690, %v1698
    %v1701 = vmul.f32 %v1699, %v1699
    %v1702 = vmul.f32 %v1700, %v1700
    %v1703 = vsel %vm109, %v1701, 0.0
    %1704 = vadd.xlane.f32.xlu0 %v1703
    %v1705 = vpop.xlane.xlu0 %1704
    %v1706 = vsel %vm109, %v1702, 0.0
    %1707 = vadd.xlane.f32.xlu0 %v1706
    %v1708 = vpop.xlane.xlu0 %1707
    %v1709 = vmul.f32 %v1705, %v766
    %v1710 = vmul.f32 %v1708, %v766
    %v1711 = vadd.f32 %v1709, 1e-05
    %v1712 = vadd.f32 %v1710, 1e-05
    %v1713 = vrsqrt.pop %v1711
    %v1714 = vmul.f32 %v1713, %v1711
    %v1715 = vmul.f32 %v1714, %v1713
    %v1716 = vmul.f32 0.5, %v1715
    %v1717 = vsub.f32 1.5, %v1716
    %v1718 = vmul.f32 %v1713, %v1717
    %vm1719 = vweird.f32 %v1711
    %vm1720 = vweird.f32 %v1713
    %vm1721 = vmor %vm1719, %vm1720
    %v1722 = vsel %vm1721, %v1713, %v1718
    %v1723 = vrsqrt.pop %v1712
    %v1724 = vmul.f32 %v1723, %v1712
    %v1725 = vmul.f32 %v1724, %v1723
    %v1726 = vmul.f32 0.5, %v1725
    %v1727 = vsub.f32 1.5, %v1726
    %v1728 = vmul.f32 %v1723, %v1727
    %vm1729 = vweird.f32 %v1712
    %vm1730 = vweird.f32 %v1723
    %vm1731 = vmor %vm1729, %vm1730
    %v1732 = vsel %vm1731, %v1723, %v1728
    %v1733 = vmul.f32 %v1699, %v1722
    %v1734 = vmul.f32 %v1700, %v1732
    %v1735 = vmul.f32 %v1733, %v929
    %v1736 = vmul.f32 %v1734, %v929
    %v1737 = vadd.f32 %v1735, %v934
    %v1738 = vadd.f32 %v1736, %v934
    %v1739 = vld [vmem:[%s13] sm:$0xff]
    %v1740 = vld [vmem:[%s13 + $0x8] sm:$0xff]
    %v1741 = vld [vmem:[%s13 + $0x10] sm:$0xff]
    %v1742 = vld [vmem:[%s13 + $0x18] sm:$0xff]
    %v1743 = vld [vmem:[%s14] sm:$0x1]
    %v1745 = vperm.slane %v1743, 0
    %v1748 = vsel %vm109, %v1737, 0
    %v1751 = vsel %vm109, %v1738, 0
    %1753 = vmatpush.msra.mxu0 0.0
    %1754 = vmatpush.msra.mxu0 0.0
    %1755 = vmatpush.msra.mxu0 0.0
    %1756 = vmatpush.msra.mxu0 0.0
    %1757 = vmatpush.msra.mxu0 0.0
    %1758 = vmatpush.msra.mxu0 0.0
    %1759 = vmatpush.msra.mxu0 0.0
    %1760 = vmatpush.msra.mxu0 0.0
    %1761 = vmatpush.msra.mxu0 0.0
    %1762 = vmatpush.msra.mxu0 0.0
    %1763 = vmatpush.msra.mxu0 0.0
    %1764 = vmatpush.msra.mxu0 0.0
    %1765 = vmatpush.msra.mxu0 %v1742
    %1766 = vmatpush.msra.mxu0 %v1741
    %1767 = vmatpush.msra.mxu0 %v1740
    %1768 = vmatpush.msra.mxu0 %v1739
    %1769 = vmatmul.f32.gmra.mxu0 %v1748
    %v1770 = vpop.f32.mrf.mxu0
    %v1771 = vadd.f32 %v1745, %v1770
    %1772 = vmatmul.f32.gmra.mxu0 %v1751
    %v1773 = vpop.f32.mrf.mxu0
    %v1774 = vadd.f32 %v1745, %v1773
    %1775 = vdwg.mxu0
    %1776 = vmax.xlane.f32.xlu0 %v1771
    %v1777 = vpop.xlane.xlu0 %1776
    %1778 = vmax.xlane.f32.xlu0 %v1774
    %v1779 = vpop.xlane.xlu0 %1778
    %v1780 = vsub.f32 %v1771, %v1777
    %v1781 = vsub.f32 %v1774, %v1779
    %v1782 = vmul.f32 %v1780, 1.442695
    %v1783 = vpow.pop %v1782
    %v1784 = vmul.f32 %v1781, 1.442695
    %v1785 = vpow.pop %v1784
    %1786 = vadd.xlane.f32.xlu0 %v1783
    %v1787 = vpop.xlane.xlu0 %1786
    %1788 = vadd.xlane.f32.xlu0 %v1785
    %v1789 = vpop.xlane.xlu0 %1788
    %v1790 = vlog2.pop %v1787
    %v1791 = vmul.f32 %v1790, 0.6931472
    %v1792 = vlog2.pop %v1789
    %v1793 = vmul.f32 %v1792, 0.6931472
    %v1794 = vsub.f32 %v1780, %v1791
    %v1795 = vsub.f32 %v1781, %v1793
    %1796 = vst [vmem:[%s15] sm:$0xff] %v1794
    %1797 = vst [vmem:[%s15 + $0x8] sm:$0xff] %v1795
    // Predicated region
    $region66: #{forward.1} parent=1 // pred_check
      _
    $region67: #{forward.1} parent=1 // pred_check_branch
      %1799 = sbr.rel (0) target = $region69
    $region68: #{forward.1} parent=1 // pred_region
      _
    $region69: #{forward.1} parent=1 // pred_fallthru
      _
    // Predicated region
    $region70: #{forward.1} parent=1 // pred_check
      _
    $region71: #{forward.1} parent=1 // pred_check_branch
      %1801 = sbr.rel (0) target = $region73
    $region72: #{forward.1} parent=1 // pred_region
      _
    $region73: #{forward.1} parent=1 // pred_fallthru
      _
    %1802 = vsyncpa [#allocation3], 1

</llo_original>
